<compile_context>
chip_gen: v7x
topology: tpu7x:2x2x1
jax: 0.10.0
libtpu: 0.0.40
codegen_flags: <defaults>
</compile_context>

<pallas_src>
import jax
import jax.numpy as jnp
import numpy as np
from jax.experimental import pallas as pl
from jax.experimental.pallas import tpu as pltpu


# -----------------------------------------------------------------------------------
# Fused kernel: conv1+relu+pool -> conv2+relu+pool -> fc1+relu -> fc2
# -----------------------------------------------------------------------------------
def _simple_cnn_kernel(im1_ref, w1_ref, b1_ref, w2_ref, b2_ref,
                       fc1w_ref, fc1b_ref, fc2w_ref, fc2b_ref, o_ref):
    """Refs:
      im1_ref : (4*N*49, 9)   conv1 im2col rows, ordered (hpar, wpar, n, i, j) where the
                              conv1 output position is (2*i + hpar, 2*j + wpar)
      w1_ref  : (9, 32)       conv1 weight, row index = kh*3 + kw
      b1_ref  : (1, 32)
      w2_ref  : (3, 3, 32, 64) conv2 weight (HWIO)
      b2_ref  : (1, 64)
      fc1w_ref: (256, 128)    fc1 weight, rows permuted to NHWC-flatten order
      fc1b_ref: (1, 128)
      fc2w_ref: (128, 10)
      fc2b_ref: (1, 10)
      o_ref   : (N, 10)
    """
    f32 = jnp.float32
    n = o_ref.shape[0]

    # ---- conv1 + bias + ReLU: one matmul over the whole batch ----------------------
    y1 = jnp.dot(im1_ref[...], w1_ref[...], preferred_element_type=f32)
    y1 = jnp.maximum(y1 + b1_ref[...], 0.0)                  # (4*n*49, 32)

    # ---- 2x2 max-pool (floor): thanks to the (hpar, wpar, ...) row ordering both
    #      pooling directions are just "max of the two halves".
    half = 2 * n * 49
    hp = jnp.maximum(y1[:half, :], y1[half:, :])             # (2*n*49, 32) rows (wpar,n,i,j)
    quarter = n * 49
    pool1 = jnp.maximum(hp[:quarter, :], hp[quarter:, :])    # (n*49, 32)   rows (n,i,j), 7x7

    # ---- conv2 + bias + ReLU: 9 per-tap matmuls with K=32, summed -------------------
    # Output rows ordered (hpar2, n, i2, ow2); only the 4x4 conv2 positions that the
    # floor 2x2 pool keeps are computed (the 5th conv2 row/col is dropped by the pool).
    y2 = None
    for kh in range(3):
        for kw in range(3):
            pieces = []
            for hpar2 in range(2):
                for b in range(n):
                    for i2 in range(2):
                        r0 = b * 49 + (2 * i2 + hpar2 + kh) * 7 + kw
                        pieces.append(pool1[r0:r0 + 4, :])   # ow2 = 0..3
            tap = jnp.concatenate(pieces, axis=0)            # (16*n, 32)
            contrib = jnp.dot(tap, w2_ref[kh, kw], preferred_element_type=f32)
            y2 = contrib if y2 is None else y2 + contrib
    y2 = jnp.maximum(y2 + b2_ref[...], 0.0)                  # (16*n, 64)

    # ---- conv2 2x2 max-pool + flatten folded directly into fc1 ----------------------
    hp2 = jnp.maximum(y2[:8 * n, :], y2[8 * n:, :])          # (8*n, 64) rows (n, i2, ow2)
    fc1_acc = None
    for i2 in range(2):
        for j2 in range(2):
            k = i2 * 2 + j2                                  # NHWC spatial chunk id
            rows = []
            for b in range(n):
                r = b * 8 + i2 * 4 + 2 * j2
                rows.append(jnp.maximum(hp2[r:r + 1, :], hp2[r + 1:r + 2, :]))
            chunk = jnp.concatenate(rows, axis=0)            # (n, 64) pooled conv2 @ (i2,j2)
            contrib = jnp.dot(chunk, fc1w_ref[k * 64:(k + 1) * 64, :],
                              preferred_element_type=f32)    # (n, 128)
            fc1_acc = contrib if fc1_acc is None else fc1_acc + contrib

    h = jnp.maximum(fc1_acc + fc1b_ref[...], 0.0)            # (n, 128)
    o_ref[...] = jnp.dot(h, fc2w_ref[...], preferred_element_type=f32) + fc2b_ref[...]


# -----------------------------------------------------------------------------------
# Wrapper glue
# -----------------------------------------------------------------------------------
def _conv1_im2col(x_nchw):
    """(N, 1, 16, 16) -> (4*N*49, 9) conv1 patch matrix with pool-parity row ordering."""
    n = x_nchw.shape[0]
    xs = x_nchw.reshape(n, 16, 16)                                   # Cin == 1
    taps = [xs[:, kh:kh + 14, kw:kw + 14] for kh in range(3) for kw in range(3)]
    patches = jnp.stack(taps, axis=-1)                               # (N, 14, 14, 9)
    patches = patches.reshape(n, 7, 2, 7, 2, 9)                      # oh=(i,hpar), ow=(j,wpar)
    patches = patches.transpose(2, 4, 0, 1, 3, 5)                    # (hpar, wpar, n, i, j, 9)
    return patches.reshape(4 * n * 49, 9)


def prepare_params(params):
    """One-time repack (outside the jitted forward) into the layouts the kernel consumes."""
    # NCHW flatten index is c*4 + k; the kernel consumes NHWC flatten index k*64 + c.
    perm = np.reshape(np.arange(64)[None, :] * 4 + np.arange(4)[:, None], -1)
    return {
        "w1": params["w1"].reshape(9, 32),        # (kh*3 + kw, cout)
        "b1": params["b1"],
        "w2": params["w2"],                       # (3, 3, 32, 64) HWIO
        "b2": params["b2"],
        "fc1_w": params["fc1_w"][perm, :],        # fold NCHW-order flatten into the weights
        "fc1_b": params["fc1_b"],
        "fc2_w": params["fc2_w"],
        "fc2_b": params["fc2_b"],
    }


@jax.jit
def simple_cnn_forward(x_nchw, kp):
    n = x_nchw.shape[0]
    im1 = _conv1_im2col(x_nchw)
    vmem_specs = [pl.BlockSpec(memory_space=pltpu.MemorySpace.VMEM) for _ in range(9)]
    return pl.pallas_call(
        _simple_cnn_kernel,
        out_shape=jax.ShapeDtypeStruct((n, 10), jnp.float32),
        in_specs=vmem_specs,
        out_specs=pl.BlockSpec(memory_space=pltpu.MemorySpace.VMEM),
    )(im1, kp["w1"], kp["b1"], kp["w2"], kp["b2"],
      kp["fc1_w"], kp["fc1_b"], kp["fc2_w"], kp["fc2_b"])


# -----------------------------------------------------------------------------------
# Params / reference
# -----------------------------------------------------------------------------------
def init_params(key):
    k = jax.random.split(key, 8)
    return {
        "w1": jax.random.normal(k[0], (3, 3, 1, 32), jnp.float32) * 0.1,
        "b1": jax.random.normal(k[1], (1, 32), jnp.float32) * 0.1,
        "w2": jax.random.normal(k[2], (3, 3, 32, 64), jnp.float32) * 0.05,
        "b2": jax.random.normal(k[3], (1, 64), jnp.float32) * 0.05,
        "fc1_w": jax.random.normal(k[4], (256, 128), jnp.float32) * 0.05,  # NCHW-flatten rows
        "fc1_b": jax.random.normal(k[5], (1, 128), jnp.float32) * 0.05,
        "fc2_w": jax.random.normal(k[6], (128, 10), jnp.float32) * 0.05,
        "fc2_b": jax.random.normal(k[7], (1, 10), jnp.float32) * 0.05,
    }


def reference_forward(x_nchw, p):
    """Pure-JAX (XLA) reference with PyTorch semantics (NCHW-order flatten before fc1)."""
    x = jnp.transpose(x_nchw, (0, 2, 3, 1))

    def conv(x, w, b):
        y = jax.lax.conv_general_dilated(
            x, w, (1, 1), "VALID", dimension_numbers=("NHWC", "HWIO", "NHWC"))
        return jax.nn.relu(y + b.reshape(1, 1, 1, -1))

    def pool(x):
        return jax.lax.reduce_window(x, -jnp.inf, jax.lax.max,
                                     (1, 2, 2, 1), (1, 2, 2, 1), "VALID")

    x = pool(conv(x, p["w1"], p["b1"]))
    x = pool(conv(x, p["w2"], p["b2"]))
    x = jnp.transpose(x, (0, 3, 1, 2)).reshape(x.shape[0], -1)   # NCHW-order flatten
    h = jax.nn.relu(x @ p["fc1_w"] + p["fc1_b"])
    return h @ p["fc2_w"] + p["fc2_b"]


if __name__ == "__main__":
    key = jax.random.PRNGKey(0)
    pkey, xkey = jax.random.split(key)
    params = init_params(pkey)
    kparams = prepare_params(params)          # one-time weight repack (outside jit)

    # PyTorch-style NCHW input: (batch=2, channels=1, 16, 16)
    x = jax.random.normal(xkey, (2, 1, 16, 16), jnp.float32)

    out = simple_cnn_forward(x, kparams)
    out = jax.block_until_ready(out)
    assert out.shape == (2, 10)

    ref = reference_forward(x, params)
    np.testing.assert_allclose(np.asarray(out), np.asarray(ref), rtol=2e-3, atol=2e-3)

    print("KERNEL_OK")
</pallas_src>

<mosaic_0001>
module attributes {stable_mosaic.version = 11 : i64} {
  func.func @_simple_cnn_kernel(%arg0: memref<392x9xf32, #tpu.memory_space<vmem>>, %arg1: memref<9x32xf32, #tpu.memory_space<vmem>>, %arg2: memref<1x32xf32, #tpu.memory_space<vmem>>, %arg3: memref<3x3x32x64xf32, #tpu.memory_space<vmem>>, %arg4: memref<1x64xf32, #tpu.memory_space<vmem>>, %arg5: memref<256x128xf32, #tpu.memory_space<vmem>>, %arg6: memref<1x128xf32, #tpu.memory_space<vmem>>, %arg7: memref<128x10xf32, #tpu.memory_space<vmem>>, %arg8: memref<1x10xf32, #tpu.memory_space<vmem>>, %arg9: memref<2x10xf32, #tpu.memory_space<vmem>>) attributes {dimension_semantics = [], scalar_prefetch = 0 : i64, scratch_operands = 0 : i64, tpu.core_type = #tpu.core_type<tc>} {
    %c0 = arith.constant 0 : index
    %c0_0 = arith.constant 0 : index
    %0 = vector.load %arg0[%c0, %c0_0] : memref<392x9xf32, #tpu.memory_space<vmem>>, vector<392x9xf32>
    %c0_1 = arith.constant 0 : index
    %c0_2 = arith.constant 0 : index
    %1 = vector.load %arg1[%c0_1, %c0_2] : memref<9x32xf32, #tpu.memory_space<vmem>>, vector<9x32xf32>
    %cst = arith.constant dense<0.000000e+00> : vector<392x32xf32>
    %2 = tpu.matmul %0, %1, %cst {dimension_numbers = #tpu.dot_dimension_numbers<[1], [0], [0], [1], [0, 0, 1, 1], [], []>} : vector<392x9xf32>, vector<9x32xf32>, vector<392x32xf32> -> vector<392x32xf32>
    %c0_3 = arith.constant 0 : index
    %c0_4 = arith.constant 0 : index
    %3 = vector.load %arg2[%c0_3, %c0_4] : memref<1x32xf32, #tpu.memory_space<vmem>>, vector<1x32xf32>
    %4 = vector.broadcast %3 : vector<1x32xf32> to vector<392x32xf32>
    %5 = arith.addf %2, %4 : vector<392x32xf32>
    %cst_5 = arith.constant 0.000000e+00 : f32
    %6 = vector.broadcast %cst_5 : f32 to vector<392x32xf32>
    %7 = arith.maximumf %5, %6 : vector<392x32xf32>
    %8 = vector.extract_strided_slice %7 {offsets = [0, 0], sizes = [196, 32], strides = [1, 1]} : vector<392x32xf32> to vector<196x32xf32>
    %9 = vector.extract_strided_slice %7 {offsets = [196, 0], sizes = [196, 32], strides = [1, 1]} : vector<392x32xf32> to vector<196x32xf32>
    %10 = arith.maximumf %8, %9 : vector<196x32xf32>
    %11 = vector.extract_strided_slice %10 {offsets = [0, 0], sizes = [98, 32], strides = [1, 1]} : vector<196x32xf32> to vector<98x32xf32>
    %12 = vector.extract_strided_slice %10 {offsets = [98, 0], sizes = [98, 32], strides = [1, 1]} : vector<196x32xf32> to vector<98x32xf32>
    %13 = arith.maximumf %11, %12 : vector<98x32xf32>
    %14 = vector.extract_strided_slice %13 {offsets = [0, 0], sizes = [4, 32], strides = [1, 1]} : vector<98x32xf32> to vector<4x32xf32>
    %15 = vector.extract_strided_slice %13 {offsets = [14, 0], sizes = [4, 32], strides = [1, 1]} : vector<98x32xf32> to vector<4x32xf32>
    %16 = vector.extract_strided_slice %13 {offsets = [49, 0], sizes = [4, 32], strides = [1, 1]} : vector<98x32xf32> to vector<4x32xf32>
    %17 = vector.extract_strided_slice %13 {offsets = [63, 0], sizes = [4, 32], strides = [1, 1]} : vector<98x32xf32> to vector<4x32xf32>
    %18 = vector.extract_strided_slice %13 {offsets = [7, 0], sizes = [4, 32], strides = [1, 1]} : vector<98x32xf32> to vector<4x32xf32>
    %19 = vector.extract_strided_slice %13 {offsets = [21, 0], sizes = [4, 32], strides = [1, 1]} : vector<98x32xf32> to vector<4x32xf32>
    %20 = vector.extract_strided_slice %13 {offsets = [56, 0], sizes = [4, 32], strides = [1, 1]} : vector<98x32xf32> to vector<4x32xf32>
    %21 = vector.extract_strided_slice %13 {offsets = [70, 0], sizes = [4, 32], strides = [1, 1]} : vector<98x32xf32> to vector<4x32xf32>
    %22 = tpu.concatenate %14, %15, %16, %17, %18, %19, %20, %21 in 0 : vector<4x32xf32>, vector<4x32xf32>, vector<4x32xf32>, vector<4x32xf32>, vector<4x32xf32>, vector<4x32xf32>, vector<4x32xf32>, vector<4x32xf32> -> vector<32x32xf32>
    %c0_6 = arith.constant 0 : index
    %c0_7 = arith.constant 0 : index
    %c0_8 = arith.constant 0 : index
    %c0_9 = arith.constant 0 : index
    %23 = vector.load %arg3[%c0_6, %c0_7, %c0_8, %c0_9] : memref<3x3x32x64xf32, #tpu.memory_space<vmem>>, vector<1x1x32x64xf32>
    %24 = vector.shape_cast %23 : vector<1x1x32x64xf32> to vector<32x64xf32>
    %cst_10 = arith.constant dense<0.000000e+00> : vector<32x64xf32>
    %25 = tpu.matmul %22, %24, %cst_10 {dimension_numbers = #tpu.dot_dimension_numbers<[1], [0], [0], [1], [0, 0, 1, 1], [], []>} : vector<32x32xf32>, vector<32x64xf32>, vector<32x64xf32> -> vector<32x64xf32>
    %26 = vector.extract_strided_slice %13 {offsets = [1, 0], sizes = [4, 32], strides = [1, 1]} : vector<98x32xf32> to vector<4x32xf32>
    %27 = vector.extract_strided_slice %13 {offsets = [15, 0], sizes = [4, 32], strides = [1, 1]} : vector<98x32xf32> to vector<4x32xf32>
    %28 = vector.extract_strided_slice %13 {offsets = [50, 0], sizes = [4, 32], strides = [1, 1]} : vector<98x32xf32> to vector<4x32xf32>
    %29 = vector.extract_strided_slice %13 {offsets = [64, 0], sizes = [4, 32], strides = [1, 1]} : vector<98x32xf32> to vector<4x32xf32>
    %30 = vector.extract_strided_slice %13 {offsets = [8, 0], sizes = [4, 32], strides = [1, 1]} : vector<98x32xf32> to vector<4x32xf32>
    %31 = vector.extract_strided_slice %13 {offsets = [22, 0], sizes = [4, 32], strides = [1, 1]} : vector<98x32xf32> to vector<4x32xf32>
    %32 = vector.extract_strided_slice %13 {offsets = [57, 0], sizes = [4, 32], strides = [1, 1]} : vector<98x32xf32> to vector<4x32xf32>
    %33 = vector.extract_strided_slice %13 {offsets = [71, 0], sizes = [4, 32], strides = [1, 1]} : vector<98x32xf32> to vector<4x32xf32>
    %34 = tpu.concatenate %26, %27, %28, %29, %30, %31, %32, %33 in 0 : vector<4x32xf32>, vector<4x32xf32>, vector<4x32xf32>, vector<4x32xf32>, vector<4x32xf32>, vector<4x32xf32>, vector<4x32xf32>, vector<4x32xf32> -> vector<32x32xf32>
    %c0_11 = arith.constant 0 : index
    %c1 = arith.constant 1 : index
    %c0_12 = arith.constant 0 : index
    %c0_13 = arith.constant 0 : index
    %35 = vector.load %arg3[%c0_11, %c1, %c0_12, %c0_13] : memref<3x3x32x64xf32, #tpu.memory_space<vmem>>, vector<1x1x32x64xf32>
    %36 = vector.shape_cast %35 : vector<1x1x32x64xf32> to vector<32x64xf32>
    %cst_14 = arith.constant dense<0.000000e+00> : vector<32x64xf32>
    %37 = tpu.matmul %34, %36, %cst_14 {dimension_numbers = #tpu.dot_dimension_numbers<[1], [0], [0], [1], [0, 0, 1, 1], [], []>} : vector<32x32xf32>, vector<32x64xf32>, vector<32x64xf32> -> vector<32x64xf32>
    %38 = arith.addf %25, %37 : vector<32x64xf32>
    %39 = vector.extract_strided_slice %13 {offsets = [2, 0], sizes = [4, 32], strides = [1, 1]} : vector<98x32xf32> to vector<4x32xf32>
    %40 = vector.extract_strided_slice %13 {offsets = [16, 0], sizes = [4, 32], strides = [1, 1]} : vector<98x32xf32> to vector<4x32xf32>
    %41 = vector.extract_strided_slice %13 {offsets = [51, 0], sizes = [4, 32], strides = [1, 1]} : vector<98x32xf32> to vector<4x32xf32>
    %42 = vector.extract_strided_slice %13 {offsets = [65, 0], sizes = [4, 32], strides = [1, 1]} : vector<98x32xf32> to vector<4x32xf32>
    %43 = vector.extract_strided_slice %13 {offsets = [9, 0], sizes = [4, 32], strides = [1, 1]} : vector<98x32xf32> to vector<4x32xf32>
    %44 = vector.extract_strided_slice %13 {offsets = [23, 0], sizes = [4, 32], strides = [1, 1]} : vector<98x32xf32> to vector<4x32xf32>
    %45 = vector.extract_strided_slice %13 {offsets = [58, 0], sizes = [4, 32], strides = [1, 1]} : vector<98x32xf32> to vector<4x32xf32>
    %46 = vector.extract_strided_slice %13 {offsets = [72, 0], sizes = [4, 32], strides = [1, 1]} : vector<98x32xf32> to vector<4x32xf32>
    %47 = tpu.concatenate %39, %40, %41, %42, %43, %44, %45, %46 in 0 : vector<4x32xf32>, vector<4x32xf32>, vector<4x32xf32>, vector<4x32xf32>, vector<4x32xf32>, vector<4x32xf32>, vector<4x32xf32>, vector<4x32xf32> -> vector<32x32xf32>
    %c0_15 = arith.constant 0 : index
    %c2 = arith.constant 2 : index
    %c0_16 = arith.constant 0 : index
    %c0_17 = arith.constant 0 : index
    %48 = vector.load %arg3[%c0_15, %c2, %c0_16, %c0_17] : memref<3x3x32x64xf32, #tpu.memory_space<vmem>>, vector<1x1x32x64xf32>
    %49 = vector.shape_cast %48 : vector<1x1x32x64xf32> to vector<32x64xf32>
    %cst_18 = arith.constant dense<0.000000e+00> : vector<32x64xf32>
    %50 = tpu.matmul %47, %49, %cst_18 {dimension_numbers = #tpu.dot_dimension_numbers<[1], [0], [0], [1], [0, 0, 1, 1], [], []>} : vector<32x32xf32>, vector<32x64xf32>, vector<32x64xf32> -> vector<32x64xf32>
    %51 = arith.addf %38, %50 : vector<32x64xf32>
    %52 = vector.extract_strided_slice %13 {offsets = [7, 0], sizes = [4, 32], strides = [1, 1]} : vector<98x32xf32> to vector<4x32xf32>
    %53 = vector.extract_strided_slice %13 {offsets = [21, 0], sizes = [4, 32], strides = [1, 1]} : vector<98x32xf32> to vector<4x32xf32>
    %54 = vector.extract_strided_slice %13 {offsets = [56, 0], sizes = [4, 32], strides = [1, 1]} : vector<98x32xf32> to vector<4x32xf32>
    %55 = vector.extract_strided_slice %13 {offsets = [70, 0], sizes = [4, 32], strides = [1, 1]} : vector<98x32xf32> to vector<4x32xf32>
    %56 = vector.extract_strided_slice %13 {offsets = [14, 0], sizes = [4, 32], strides = [1, 1]} : vector<98x32xf32> to vector<4x32xf32>
    %57 = vector.extract_strided_slice %13 {offsets = [28, 0], sizes = [4, 32], strides = [1, 1]} : vector<98x32xf32> to vector<4x32xf32>
    %58 = vector.extract_strided_slice %13 {offsets = [63, 0], sizes = [4, 32], strides = [1, 1]} : vector<98x32xf32> to vector<4x32xf32>
    %59 = vector.extract_strided_slice %13 {offsets = [77, 0], sizes = [4, 32], strides = [1, 1]} : vector<98x32xf32> to vector<4x32xf32>
    %60 = tpu.concatenate %52, %53, %54, %55, %56, %57, %58, %59 in 0 : vector<4x32xf32>, vector<4x32xf32>, vector<4x32xf32>, vector<4x32xf32>, vector<4x32xf32>, vector<4x32xf32>, vector<4x32xf32>, vector<4x32xf32> -> vector<32x32xf32>
    %c1_19 = arith.constant 1 : index
    %c0_20 = arith.constant 0 : index
    %c0_21 = arith.constant 0 : index
    %c0_22 = arith.constant 0 : index
    %61 = vector.load %arg3[%c1_19, %c0_20, %c0_21, %c0_22] : memref<3x3x32x64xf32, #tpu.memory_space<vmem>>, vector<1x1x32x64xf32>
    %62 = vector.shape_cast %61 : vector<1x1x32x64xf32> to vector<32x64xf32>
    %cst_23 = arith.constant dense<0.000000e+00> : vector<32x64xf32>
    %63 = tpu.matmul %60, %62, %cst_23 {dimension_numbers = #tpu.dot_dimension_numbers<[1], [0], [0], [1], [0, 0, 1, 1], [], []>} : vector<32x32xf32>, vector<32x64xf32>, vector<32x64xf32> -> vector<32x64xf32>
    %64 = arith.addf %51, %63 : vector<32x64xf32>
    %65 = vector.extract_strided_slice %13 {offsets = [8, 0], sizes = [4, 32], strides = [1, 1]} : vector<98x32xf32> to vector<4x32xf32>
    %66 = vector.extract_strided_slice %13 {offsets = [22, 0], sizes = [4, 32], strides = [1, 1]} : vector<98x32xf32> to vector<4x32xf32>
    %67 = vector.extract_strided_slice %13 {offsets = [57, 0], sizes = [4, 32], strides = [1, 1]} : vector<98x32xf32> to vector<4x32xf32>
    %68 = vector.extract_strided_slice %13 {offsets = [71, 0], sizes = [4, 32], strides = [1, 1]} : vector<98x32xf32> to vector<4x32xf32>
    %69 = vector.extract_strided_slice %13 {offsets = [15, 0], sizes = [4, 32], strides = [1, 1]} : vector<98x32xf32> to vector<4x32xf32>
    %70 = vector.extract_strided_slice %13 {offsets = [29, 0], sizes = [4, 32], strides = [1, 1]} : vector<98x32xf32> to vector<4x32xf32>
    %71 = vector.extract_strided_slice %13 {offsets = [64, 0], sizes = [4, 32], strides = [1, 1]} : vector<98x32xf32> to vector<4x32xf32>
    %72 = vector.extract_strided_slice %13 {offsets = [78, 0], sizes = [4, 32], strides = [1, 1]} : vector<98x32xf32> to vector<4x32xf32>
    %73 = tpu.concatenate %65, %66, %67, %68, %69, %70, %71, %72 in 0 : vector<4x32xf32>, vector<4x32xf32>, vector<4x32xf32>, vector<4x32xf32>, vector<4x32xf32>, vector<4x32xf32>, vector<4x32xf32>, vector<4x32xf32> -> vector<32x32xf32>
    %c1_24 = arith.constant 1 : index
    %c1_25 = arith.constant 1 : index
    %c0_26 = arith.constant 0 : index
    %c0_27 = arith.constant 0 : index
    %74 = vector.load %arg3[%c1_24, %c1_25, %c0_26, %c0_27] : memref<3x3x32x64xf32, #tpu.memory_space<vmem>>, vector<1x1x32x64xf32>
    %75 = vector.shape_cast %74 : vector<1x1x32x64xf32> to vector<32x64xf32>
    %cst_28 = arith.constant dense<0.000000e+00> : vector<32x64xf32>
    %76 = tpu.matmul %73, %75, %cst_28 {dimension_numbers = #tpu.dot_dimension_numbers<[1], [0], [0], [1], [0, 0, 1, 1], [], []>} : vector<32x32xf32>, vector<32x64xf32>, vector<32x64xf32> -> vector<32x64xf32>
    %77 = arith.addf %64, %76 : vector<32x64xf32>
    %78 = vector.extract_strided_slice %13 {offsets = [9, 0], sizes = [4, 32], strides = [1, 1]} : vector<98x32xf32> to vector<4x32xf32>
    %79 = vector.extract_strided_slice %13 {offsets = [23, 0], sizes = [4, 32], strides = [1, 1]} : vector<98x32xf32> to vector<4x32xf32>
    %80 = vector.extract_strided_slice %13 {offsets = [58, 0], sizes = [4, 32], strides = [1, 1]} : vector<98x32xf32> to vector<4x32xf32>
    %81 = vector.extract_strided_slice %13 {offsets = [72, 0], sizes = [4, 32], strides = [1, 1]} : vector<98x32xf32> to vector<4x32xf32>
    %82 = vector.extract_strided_slice %13 {offsets = [16, 0], sizes = [4, 32], strides = [1, 1]} : vector<98x32xf32> to vector<4x32xf32>
    %83 = vector.extract_strided_slice %13 {offsets = [30, 0], sizes = [4, 32], strides = [1, 1]} : vector<98x32xf32> to vector<4x32xf32>
    %84 = vector.extract_strided_slice %13 {offsets = [65, 0], sizes = [4, 32], strides = [1, 1]} : vector<98x32xf32> to vector<4x32xf32>
    %85 = vector.extract_strided_slice %13 {offsets = [79, 0], sizes = [4, 32], strides = [1, 1]} : vector<98x32xf32> to vector<4x32xf32>
    %86 = tpu.concatenate %78, %79, %80, %81, %82, %83, %84, %85 in 0 : vector<4x32xf32>, vector<4x32xf32>, vector<4x32xf32>, vector<4x32xf32>, vector<4x32xf32>, vector<4x32xf32>, vector<4x32xf32>, vector<4x32xf32> -> vector<32x32xf32>
    %c1_29 = arith.constant 1 : index
    %c2_30 = arith.constant 2 : index
    %c0_31 = arith.constant 0 : index
    %c0_32 = arith.constant 0 : index
    %87 = vector.load %arg3[%c1_29, %c2_30, %c0_31, %c0_32] : memref<3x3x32x64xf32, #tpu.memory_space<vmem>>, vector<1x1x32x64xf32>
    %88 = vector.shape_cast %87 : vector<1x1x32x64xf32> to vector<32x64xf32>
    %cst_33 = arith.constant dense<0.000000e+00> : vector<32x64xf32>
    %89 = tpu.matmul %86, %88, %cst_33 {dimension_numbers = #tpu.dot_dimension_numbers<[1], [0], [0], [1], [0, 0, 1, 1], [], []>} : vector<32x32xf32>, vector<32x64xf32>, vector<32x64xf32> -> vector<32x64xf32>
    %90 = arith.addf %77, %89 : vector<32x64xf32>
    %91 = vector.extract_strided_slice %13 {offsets = [14, 0], sizes = [4, 32], strides = [1, 1]} : vector<98x32xf32> to vector<4x32xf32>
    %92 = vector.extract_strided_slice %13 {offsets = [28, 0], sizes = [4, 32], strides = [1, 1]} : vector<98x32xf32> to vector<4x32xf32>
    %93 = vector.extract_strided_slice %13 {offsets = [63, 0], sizes = [4, 32], strides = [1, 1]} : vector<98x32xf32> to vector<4x32xf32>
    %94 = vector.extract_strided_slice %13 {offsets = [77, 0], sizes = [4, 32], strides = [1, 1]} : vector<98x32xf32> to vector<4x32xf32>
    %95 = vector.extract_strided_slice %13 {offsets = [21, 0], sizes = [4, 32], strides = [1, 1]} : vector<98x32xf32> to vector<4x32xf32>
    %96 = vector.extract_strided_slice %13 {offsets = [35, 0], sizes = [4, 32], strides = [1, 1]} : vector<98x32xf32> to vector<4x32xf32>
    %97 = vector.extract_strided_slice %13 {offsets = [70, 0], sizes = [4, 32], strides = [1, 1]} : vector<98x32xf32> to vector<4x32xf32>
    %98 = vector.extract_strided_slice %13 {offsets = [84, 0], sizes = [4, 32], strides = [1, 1]} : vector<98x32xf32> to vector<4x32xf32>
    %99 = tpu.concatenate %91, %92, %93, %94, %95, %96, %97, %98 in 0 : vector<4x32xf32>, vector<4x32xf32>, vector<4x32xf32>, vector<4x32xf32>, vector<4x32xf32>, vector<4x32xf32>, vector<4x32xf32>, vector<4x32xf32> -> vector<32x32xf32>
    %c2_34 = arith.constant 2 : index
    %c0_35 = arith.constant 0 : index
    %c0_36 = arith.constant 0 : index
    %c0_37 = arith.constant 0 : index
    %100 = vector.load %arg3[%c2_34, %c0_35, %c0_36, %c0_37] : memref<3x3x32x64xf32, #tpu.memory_space<vmem>>, vector<1x1x32x64xf32>
    %101 = vector.shape_cast %100 : vector<1x1x32x64xf32> to vector<32x64xf32>
    %cst_38 = arith.constant dense<0.000000e+00> : vector<32x64xf32>
    %102 = tpu.matmul %99, %101, %cst_38 {dimension_numbers = #tpu.dot_dimension_numbers<[1], [0], [0], [1], [0, 0, 1, 1], [], []>} : vector<32x32xf32>, vector<32x64xf32>, vector<32x64xf32> -> vector<32x64xf32>
    %103 = arith.addf %90, %102 : vector<32x64xf32>
    %104 = vector.extract_strided_slice %13 {offsets = [15, 0], sizes = [4, 32], strides = [1, 1]} : vector<98x32xf32> to vector<4x32xf32>
    %105 = vector.extract_strided_slice %13 {offsets = [29, 0], sizes = [4, 32], strides = [1, 1]} : vector<98x32xf32> to vector<4x32xf32>
    %106 = vector.extract_strided_slice %13 {offsets = [64, 0], sizes = [4, 32], strides = [1, 1]} : vector<98x32xf32> to vector<4x32xf32>
    %107 = vector.extract_strided_slice %13 {offsets = [78, 0], sizes = [4, 32], strides = [1, 1]} : vector<98x32xf32> to vector<4x32xf32>
    %108 = vector.extract_strided_slice %13 {offsets = [22, 0], sizes = [4, 32], strides = [1, 1]} : vector<98x32xf32> to vector<4x32xf32>
    %109 = vector.extract_strided_slice %13 {offsets = [36, 0], sizes = [4, 32], strides = [1, 1]} : vector<98x32xf32> to vector<4x32xf32>
    %110 = vector.extract_strided_slice %13 {offsets = [71, 0], sizes = [4, 32], strides = [1, 1]} : vector<98x32xf32> to vector<4x32xf32>
    %111 = vector.extract_strided_slice %13 {offsets = [85, 0], sizes = [4, 32], strides = [1, 1]} : vector<98x32xf32> to vector<4x32xf32>
    %112 = tpu.concatenate %104, %105, %106, %107, %108, %109, %110, %111 in 0 : vector<4x32xf32>, vector<4x32xf32>, vector<4x32xf32>, vector<4x32xf32>, vector<4x32xf32>, vector<4x32xf32>, vector<4x32xf32>, vector<4x32xf32> -> vector<32x32xf32>
    %c2_39 = arith.constant 2 : index
    %c1_40 = arith.constant 1 : index
    %c0_41 = arith.constant 0 : index
    %c0_42 = arith.constant 0 : index
    %113 = vector.load %arg3[%c2_39, %c1_40, %c0_41, %c0_42] : memref<3x3x32x64xf32, #tpu.memory_space<vmem>>, vector<1x1x32x64xf32>
    %114 = vector.shape_cast %113 : vector<1x1x32x64xf32> to vector<32x64xf32>
    %cst_43 = arith.constant dense<0.000000e+00> : vector<32x64xf32>
    %115 = tpu.matmul %112, %114, %cst_43 {dimension_numbers = #tpu.dot_dimension_numbers<[1], [0], [0], [1], [0, 0, 1, 1], [], []>} : vector<32x32xf32>, vector<32x64xf32>, vector<32x64xf32> -> vector<32x64xf32>
    %116 = arith.addf %103, %115 : vector<32x64xf32>
    %117 = vector.extract_strided_slice %13 {offsets = [16, 0], sizes = [4, 32], strides = [1, 1]} : vector<98x32xf32> to vector<4x32xf32>
    %118 = vector.extract_strided_slice %13 {offsets = [30, 0], sizes = [4, 32], strides = [1, 1]} : vector<98x32xf32> to vector<4x32xf32>
    %119 = vector.extract_strided_slice %13 {offsets = [65, 0], sizes = [4, 32], strides = [1, 1]} : vector<98x32xf32> to vector<4x32xf32>
    %120 = vector.extract_strided_slice %13 {offsets = [79, 0], sizes = [4, 32], strides = [1, 1]} : vector<98x32xf32> to vector<4x32xf32>
    %121 = vector.extract_strided_slice %13 {offsets = [23, 0], sizes = [4, 32], strides = [1, 1]} : vector<98x32xf32> to vector<4x32xf32>
    %122 = vector.extract_strided_slice %13 {offsets = [37, 0], sizes = [4, 32], strides = [1, 1]} : vector<98x32xf32> to vector<4x32xf32>
    %123 = vector.extract_strided_slice %13 {offsets = [72, 0], sizes = [4, 32], strides = [1, 1]} : vector<98x32xf32> to vector<4x32xf32>
    %124 = vector.extract_strided_slice %13 {offsets = [86, 0], sizes = [4, 32], strides = [1, 1]} : vector<98x32xf32> to vector<4x32xf32>
    %125 = tpu.concatenate %117, %118, %119, %120, %121, %122, %123, %124 in 0 : vector<4x32xf32>, vector<4x32xf32>, vector<4x32xf32>, vector<4x32xf32>, vector<4x32xf32>, vector<4x32xf32>, vector<4x32xf32>, vector<4x32xf32> -> vector<32x32xf32>
    %c2_44 = arith.constant 2 : index
    %c2_45 = arith.constant 2 : index
    %c0_46 = arith.constant 0 : index
    %c0_47 = arith.constant 0 : index
    %126 = vector.load %arg3[%c2_44, %c2_45, %c0_46, %c0_47] : memref<3x3x32x64xf32, #tpu.memory_space<vmem>>, vector<1x1x32x64xf32>
    %127 = vector.shape_cast %126 : vector<1x1x32x64xf32> to vector<32x64xf32>
    %cst_48 = arith.constant dense<0.000000e+00> : vector<32x64xf32>
    %128 = tpu.matmul %125, %127, %cst_48 {dimension_numbers = #tpu.dot_dimension_numbers<[1], [0], [0], [1], [0, 0, 1, 1], [], []>} : vector<32x32xf32>, vector<32x64xf32>, vector<32x64xf32> -> vector<32x64xf32>
    %129 = arith.addf %116, %128 : vector<32x64xf32>
    %c0_49 = arith.constant 0 : index
    %c0_50 = arith.constant 0 : index
    %130 = vector.load %arg4[%c0_49, %c0_50] : memref<1x64xf32, #tpu.memory_space<vmem>>, vector<1x64xf32>
    %131 = vector.broadcast %130 : vector<1x64xf32> to vector<32x64xf32>
    %132 = arith.addf %129, %131 : vector<32x64xf32>
    %cst_51 = arith.constant 0.000000e+00 : f32
    %133 = vector.broadcast %cst_51 : f32 to vector<32x64xf32>
    %134 = arith.maximumf %132, %133 : vector<32x64xf32>
    %135 = vector.extract_strided_slice %134 {offsets = [0, 0], sizes = [16, 64], strides = [1, 1]} : vector<32x64xf32> to vector<16x64xf32>
    %136 = vector.extract_strided_slice %134 {offsets = [16, 0], sizes = [16, 64], strides = [1, 1]} : vector<32x64xf32> to vector<16x64xf32>
    %137 = arith.maximumf %135, %136 : vector<16x64xf32>
    %138 = vector.extract_strided_slice %137 {offsets = [0, 0], sizes = [1, 64], strides = [1, 1]} : vector<16x64xf32> to vector<1x64xf32>
    %139 = vector.extract_strided_slice %137 {offsets = [1, 0], sizes = [1, 64], strides = [1, 1]} : vector<16x64xf32> to vector<1x64xf32>
    %140 = arith.maximumf %138, %139 : vector<1x64xf32>
    %141 = vector.extract_strided_slice %137 {offsets = [8, 0], sizes = [1, 64], strides = [1, 1]} : vector<16x64xf32> to vector<1x64xf32>
    %142 = vector.extract_strided_slice %137 {offsets = [9, 0], sizes = [1, 64], strides = [1, 1]} : vector<16x64xf32> to vector<1x64xf32>
    %143 = arith.maximumf %141, %142 : vector<1x64xf32>
    %144 = tpu.concatenate %140, %143 in 0 : vector<1x64xf32>, vector<1x64xf32> -> vector<2x64xf32>
    %c0_52 = arith.constant 0 : index
    %c0_53 = arith.constant 0 : index
    %145 = vector.load %arg5[%c0_52, %c0_53] : memref<256x128xf32, #tpu.memory_space<vmem>>, vector<64x128xf32>
    %cst_54 = arith.constant dense<0.000000e+00> : vector<2x128xf32>
    %146 = tpu.matmul %144, %145, %cst_54 {dimension_numbers = #tpu.dot_dimension_numbers<[1], [0], [0], [1], [0, 0, 1, 1], [], []>} : vector<2x64xf32>, vector<64x128xf32>, vector<2x128xf32> -> vector<2x128xf32>
    %147 = vector.extract_strided_slice %137 {offsets = [2, 0], sizes = [1, 64], strides = [1, 1]} : vector<16x64xf32> to vector<1x64xf32>
    %148 = vector.extract_strided_slice %137 {offsets = [3, 0], sizes = [1, 64], strides = [1, 1]} : vector<16x64xf32> to vector<1x64xf32>
    %149 = arith.maximumf %147, %148 : vector<1x64xf32>
    %150 = vector.extract_strided_slice %137 {offsets = [10, 0], sizes = [1, 64], strides = [1, 1]} : vector<16x64xf32> to vector<1x64xf32>
    %151 = vector.extract_strided_slice %137 {offsets = [11, 0], sizes = [1, 64], strides = [1, 1]} : vector<16x64xf32> to vector<1x64xf32>
    %152 = arith.maximumf %150, %151 : vector<1x64xf32>
    %153 = tpu.concatenate %149, %152 in 0 : vector<1x64xf32>, vector<1x64xf32> -> vector<2x64xf32>
    %c64 = arith.constant 64 : index
    %c0_55 = arith.constant 0 : index
    %154 = vector.load %arg5[%c64, %c0_55] : memref<256x128xf32, #tpu.memory_space<vmem>>, vector<64x128xf32>
    %cst_56 = arith.constant dense<0.000000e+00> : vector<2x128xf32>
    %155 = tpu.matmul %153, %154, %cst_56 {dimension_numbers = #tpu.dot_dimension_numbers<[1], [0], [0], [1], [0, 0, 1, 1], [], []>} : vector<2x64xf32>, vector<64x128xf32>, vector<2x128xf32> -> vector<2x128xf32>
    %156 = arith.addf %146, %155 : vector<2x128xf32>
    %157 = vector.extract_strided_slice %137 {offsets = [4, 0], sizes = [1, 64], strides = [1, 1]} : vector<16x64xf32> to vector<1x64xf32>
    %158 = vector.extract_strided_slice %137 {offsets = [5, 0], sizes = [1, 64], strides = [1, 1]} : vector<16x64xf32> to vector<1x64xf32>
    %159 = arith.maximumf %157, %158 : vector<1x64xf32>
    %160 = vector.extract_strided_slice %137 {offsets = [12, 0], sizes = [1, 64], strides = [1, 1]} : vector<16x64xf32> to vector<1x64xf32>
    %161 = vector.extract_strided_slice %137 {offsets = [13, 0], sizes = [1, 64], strides = [1, 1]} : vector<16x64xf32> to vector<1x64xf32>
    %162 = arith.maximumf %160, %161 : vector<1x64xf32>
    %163 = tpu.concatenate %159, %162 in 0 : vector<1x64xf32>, vector<1x64xf32> -> vector<2x64xf32>
    %c128 = arith.constant 128 : index
    %c0_57 = arith.constant 0 : index
    %164 = vector.load %arg5[%c128, %c0_57] : memref<256x128xf32, #tpu.memory_space<vmem>>, vector<64x128xf32>
    %cst_58 = arith.constant dense<0.000000e+00> : vector<2x128xf32>
    %165 = tpu.matmul %163, %164, %cst_58 {dimension_numbers = #tpu.dot_dimension_numbers<[1], [0], [0], [1], [0, 0, 1, 1], [], []>} : vector<2x64xf32>, vector<64x128xf32>, vector<2x128xf32> -> vector<2x128xf32>
    %166 = arith.addf %156, %165 : vector<2x128xf32>
    %167 = vector.extract_strided_slice %137 {offsets = [6, 0], sizes = [1, 64], strides = [1, 1]} : vector<16x64xf32> to vector<1x64xf32>
    %168 = vector.extract_strided_slice %137 {offsets = [7, 0], sizes = [1, 64], strides = [1, 1]} : vector<16x64xf32> to vector<1x64xf32>
    %169 = arith.maximumf %167, %168 : vector<1x64xf32>
    %170 = vector.extract_strided_slice %137 {offsets = [14, 0], sizes = [1, 64], strides = [1, 1]} : vector<16x64xf32> to vector<1x64xf32>
    %171 = vector.extract_strided_slice %137 {offsets = [15, 0], sizes = [1, 64], strides = [1, 1]} : vector<16x64xf32> to vector<1x64xf32>
    %172 = arith.maximumf %170, %171 : vector<1x64xf32>
    %173 = tpu.concatenate %169, %172 in 0 : vector<1x64xf32>, vector<1x64xf32> -> vector<2x64xf32>
    %c192 = arith.constant 192 : index
    %c0_59 = arith.constant 0 : index
    %174 = vector.load %arg5[%c192, %c0_59] : memref<256x128xf32, #tpu.memory_space<vmem>>, vector<64x128xf32>
    %cst_60 = arith.constant dense<0.000000e+00> : vector<2x128xf32>
    %175 = tpu.matmul %173, %174, %cst_60 {dimension_numbers = #tpu.dot_dimension_numbers<[1], [0], [0], [1], [0, 0, 1, 1], [], []>} : vector<2x64xf32>, vector<64x128xf32>, vector<2x128xf32> -> vector<2x128xf32>
    %176 = arith.addf %166, %175 : vector<2x128xf32>
    %c0_61 = arith.constant 0 : index
    %c0_62 = arith.constant 0 : index
    %177 = vector.load %arg6[%c0_61, %c0_62] : memref<1x128xf32, #tpu.memory_space<vmem>>, vector<1x128xf32>
    %178 = vector.broadcast %177 : vector<1x128xf32> to vector<2x128xf32>
    %179 = arith.addf %176, %178 : vector<2x128xf32>
    %cst_63 = arith.constant 0.000000e+00 : f32
    %180 = vector.broadcast %cst_63 : f32 to vector<2x128xf32>
    %181 = arith.maximumf %179, %180 : vector<2x128xf32>
    %c0_64 = arith.constant 0 : index
    %c0_65 = arith.constant 0 : index
    %182 = vector.load %arg7[%c0_64, %c0_65] : memref<128x10xf32, #tpu.memory_space<vmem>>, vector<128x10xf32>
    %cst_66 = arith.constant dense<0.000000e+00> : vector<2x10xf32>
    %183 = tpu.matmul %181, %182, %cst_66 {dimension_numbers = #tpu.dot_dimension_numbers<[1], [0], [0], [1], [0, 0, 1, 1], [], []>} : vector<2x128xf32>, vector<128x10xf32>, vector<2x10xf32> -> vector<2x10xf32>
    %c0_67 = arith.constant 0 : index
    %c0_68 = arith.constant 0 : index
    %184 = vector.load %arg8[%c0_67, %c0_68] : memref<1x10xf32, #tpu.memory_space<vmem>>, vector<1x10xf32>
    %185 = vector.broadcast %184 : vector<1x10xf32> to vector<2x10xf32>
    %186 = arith.addf %183, %185 : vector<2x10xf32>
    %c0_69 = arith.constant 0 : index
    %c0_70 = arith.constant 0 : index
    %187 = vector.load %arg9[%c0_69, %c0_70] : memref<2x10xf32, #tpu.memory_space<vmem>>, vector<2x10xf32>
    tpu.vector_store %arg9[%c0_69, %c0_70], %186 {strides = array<i32>} : memref<2x10xf32, #tpu.memory_space<vmem>>, vector<2x10xf32>,
    return
  }
}

</mosaic_0001>

<llo_original>
// kernel: simple_cnn_forward.1
$region0: #{simple_cnn_forward.1}
  #allocation0 [shape = 'u32[]', space=smem, size = 0x4, offset = 0x4, fixed_abs, tag = 'smem constant byte address 0x4 - core index']
  #allocation1 [shape = 'u32[144,128]{1,0:T(1,128)}', space=vmem, size = 0x12000, scoped, tag = 'internal scratch']
  %s0 = inlined_call_operand.vmem [shape: f32[392,9], index: 0, kind: input, shape index: {}]
  %s1 = inlined_call_operand.vmem [shape: f32[9,32], index: 1, kind: input, shape index: {}]
  %s2 = inlined_call_operand.vmem [shape: f32[1,32], index: 2, kind: input, shape index: {}]
  %s3 = inlined_call_operand.vmem [shape: f32[3,3,32,64], index: 3, kind: input, shape index: {}]
  %s4 = inlined_call_operand.vmem [shape: f32[1,64], index: 4, kind: input, shape index: {}]
  %s5 = inlined_call_operand.vmem [shape: f32[256,128], index: 5, kind: input, shape index: {}]
  %s6 = inlined_call_operand.vmem [shape: f32[1,128], index: 6, kind: input, shape index: {}]
  %s7 = inlined_call_operand.vmem [shape: f32[128,10], index: 7, kind: input, shape index: {}]
  %s8 = inlined_call_operand.vmem [shape: f32[1,10], index: 8, kind: input, shape index: {}]
  %s9 = inlined_call_operand.hbm [shape: f32[2,10], index: 9, kind: output, shape index: {}]
  %s10 = sld [smem:[#allocation0]]
  $region46: #{simple_cnn_forward.1} parent=0
    _
  %s12 = ssub.s32 1, %s10
  %s13 = scalar_select 0, %s12, %s10
  $region1: #{simple_cnn_forward.1} parent=0
    #allocation2 [shape = 'u8[1024]{0}', space=vmem, size = 0x400, scoped, tag = 'output window, operand 0, single buffered']
    #allocation3 [shape = 's32[1]{0}', space=sflag, size = 0x4, scoped, tag = 'scoped memory for simple_cnn_forward.1']
    %14 = vsyncpa [#allocation3], 0
    // Predicated region
    $region2: #{simple_cnn_forward.1} parent=1 // pred_check
      _
    $region3: #{simple_cnn_forward.1} parent=1 // pred_check_branch
      %16 = sbr.rel (0) target = $region5
    $region4: #{simple_cnn_forward.1} parent=1 // pred_region
      _
    $region5: #{simple_cnn_forward.1} parent=1 // pred_fallthru
      _
    // Predicated region
    $region6: #{simple_cnn_forward.1} parent=1 // pred_check
      _
    $region7: #{simple_cnn_forward.1} parent=1 // pred_check_branch
      %18 = sbr.rel (0) target = $region9
    $region8: #{simple_cnn_forward.1} parent=1 // pred_region
      _
    $region9: #{simple_cnn_forward.1} parent=1 // pred_fallthru
      _
    // Predicated region
    $region10: #{simple_cnn_forward.1} parent=1 // pred_check
      _
    $region11: #{simple_cnn_forward.1} parent=1 // pred_check_branch
      %20 = sbr.rel (0) target = $region13
    $region12: #{simple_cnn_forward.1} parent=1 // pred_region
      _
    $region13: #{simple_cnn_forward.1} parent=1 // pred_fallthru
      _
    // Predicated region
    $region14: #{simple_cnn_forward.1} parent=1 // pred_check
      _
    $region15: #{simple_cnn_forward.1} parent=1 // pred_check_branch
      %22 = sbr.rel (0) target = $region17
    $region16: #{simple_cnn_forward.1} parent=1 // pred_region
      _
    $region17: #{simple_cnn_forward.1} parent=1 // pred_fallthru
      _
    // Predicated region
    $region18: #{simple_cnn_forward.1} parent=1 // pred_check
      _
    $region19: #{simple_cnn_forward.1} parent=1 // pred_check_branch
      %24 = sbr.rel (0) target = $region21
    $region20: #{simple_cnn_forward.1} parent=1 // pred_region
      _
    $region21: #{simple_cnn_forward.1} parent=1 // pred_fallthru
      _
    // Predicated region
    $region22: #{simple_cnn_forward.1} parent=1 // pred_check
      _
    $region23: #{simple_cnn_forward.1} parent=1 // pred_check_branch
      %26 = sbr.rel (0) target = $region25
    $region24: #{simple_cnn_forward.1} parent=1 // pred_region
      _
    $region25: #{simple_cnn_forward.1} parent=1 // pred_fallthru
      _
    // Predicated region
    $region26: #{simple_cnn_forward.1} parent=1 // pred_check
      _
    $region27: #{simple_cnn_forward.1} parent=1 // pred_check_branch
      %28 = sbr.rel (0) target = $region29
    $region28: #{simple_cnn_forward.1} parent=1 // pred_region
      _
    $region29: #{simple_cnn_forward.1} parent=1 // pred_fallthru
      _
    // Predicated region
    $region30: #{simple_cnn_forward.1} parent=1 // pred_check
      _
    $region31: #{simple_cnn_forward.1} parent=1 // pred_check_branch
      %30 = sbr.rel (0) target = $region33
    $region32: #{simple_cnn_forward.1} parent=1 // pred_region
      _
    $region33: #{simple_cnn_forward.1} parent=1 // pred_fallthru
      _
    // Predicated region
    $region34: #{simple_cnn_forward.1} parent=1 // pred_check
      _
    $region35: #{simple_cnn_forward.1} parent=1 // pred_check_branch
      %32 = sbr.rel (0) target = $region37
    $region36: #{simple_cnn_forward.1} parent=1 // pred_region
      _
    $region37: #{simple_cnn_forward.1} parent=1 // pred_fallthru
      _
    %v33 = vld [vmem:[%s0] sm:$0xff]
    %v34 = vld [vmem:[%s0 + $0x8] sm:$0xff]
    %v35 = vld [vmem:[%s0 + $0x10] sm:$0xff]
    %v36 = vld [vmem:[%s0 + $0x18] sm:$0xff]
    %v37 = vld [vmem:[%s0 + $0x20] sm:$0xff]
    %v38 = vld [vmem:[%s0 + $0x28] sm:$0xff]
    %v39 = vld [vmem:[%s0 + $0x30] sm:$0xff]
    %v40 = vld [vmem:[%s0 + $0x38] sm:$0xff]
    %v41 = vld [vmem:[%s0 + $0x40] sm:$0xff]
    %v42 = vld [vmem:[%s0 + $0x48] sm:$0xff]
    %v43 = vld [vmem:[%s0 + $0x50] sm:$0xff]
    %v44 = vld [vmem:[%s0 + $0x58] sm:$0xff]
    %v45 = vld [vmem:[%s0 + $0x60] sm:$0xff]
    %v46 = vld [vmem:[%s0 + $0x68] sm:$0xff]
    %v47 = vld [vmem:[%s0 + $0x70] sm:$0xff]
    %v48 = vld [vmem:[%s0 + $0x78] sm:$0xff]
    %v49 = vld [vmem:[%s0 + $0x80] sm:$0xff]
    %v50 = vld [vmem:[%s0 + $0x88] sm:$0xff]
    %v51 = vld [vmem:[%s0 + $0x90] sm:$0xff]
    %v52 = vld [vmem:[%s0 + $0x98] sm:$0xff]
    %v53 = vld [vmem:[%s0 + $0xa0] sm:$0xff]
    %v54 = vld [vmem:[%s0 + $0xa8] sm:$0xff]
    %v55 = vld [vmem:[%s0 + $0xb0] sm:$0xff]
    %v56 = vld [vmem:[%s0 + $0xb8] sm:$0xff]
    %v57 = vld [vmem:[%s0 + $0xc0] sm:$0xff]
    %v58 = vld [vmem:[%s0 + $0xc8] sm:$0xff]
    %v59 = vld [vmem:[%s0 + $0xd0] sm:$0xff]
    %v60 = vld [vmem:[%s0 + $0xd8] sm:$0xff]
    %v61 = vld [vmem:[%s0 + $0xe0] sm:$0xff]
    %v62 = vld [vmem:[%s0 + $0xe8] sm:$0xff]
    %v63 = vld [vmem:[%s0 + $0xf0] sm:$0xff]
    %v64 = vld [vmem:[%s0 + $0xf8] sm:$0xff]
    %v65 = vld [vmem:[%s0 + $0x100] sm:$0xff]
    %v66 = vld [vmem:[%s0 + $0x108] sm:$0xff]
    %v67 = vld [vmem:[%s0 + $0x110] sm:$0xff]
    %v68 = vld [vmem:[%s0 + $0x118] sm:$0xff]
    %v69 = vld [vmem:[%s0 + $0x120] sm:$0xff]
    %v70 = vld [vmem:[%s0 + $0x128] sm:$0xff]
    %v71 = vld [vmem:[%s0 + $0x130] sm:$0xff]
    %v72 = vld [vmem:[%s0 + $0x138] sm:$0xff]
    %v73 = vld [vmem:[%s0 + $0x140] sm:$0xff]
    %v74 = vld [vmem:[%s0 + $0x148] sm:$0xff]
    %v75 = vld [vmem:[%s0 + $0x150] sm:$0xff]
    %v76 = vld [vmem:[%s0 + $0x158] sm:$0xff]
    %v77 = vld [vmem:[%s0 + $0x160] sm:$0xff]
    %v78 = vld [vmem:[%s0 + $0x168] sm:$0xff]
    %v79 = vld [vmem:[%s0 + $0x170] sm:$0xff]
    %v80 = vld [vmem:[%s0 + $0x178] sm:$0xff]
    %v81 = vld [vmem:[%s0 + $0x180] sm:$0xff]
    %v82 = vld [vmem:[%s1] sm:$0xff]
    %v83 = vld [vmem:[%s1 + $0x8] sm:$0x1]
    %v84 = vld [vmem:[%s2] sm:$0x1]
    %v86 = vlaneseq
    %v87 = vshrl.u32 %v86, 7
    %v88 = vsub.s32 0, %v87
    %v89 = vrot.slane %v84, %v88
    %vm91 = vcmask 72704
    %v93 = vsel %vm91, %v33, 0
    %v96 = vsel %vm91, %v34, 0
    %v99 = vsel %vm91, %v35, 0
    %v102 = vsel %vm91, %v36, 0
    %v105 = vsel %vm91, %v37, 0
    %v108 = vsel %vm91, %v38, 0
    %v111 = vsel %vm91, %v39, 0
    %v114 = vsel %vm91, %v40, 0
    %v117 = vsel %vm91, %v41, 0
    %v120 = vsel %vm91, %v42, 0
    %v123 = vsel %vm91, %v43, 0
    %v126 = vsel %vm91, %v44, 0
    %v129 = vsel %vm91, %v45, 0
    %v132 = vsel %vm91, %v46, 0
    %v135 = vsel %vm91, %v47, 0
    %v138 = vsel %vm91, %v48, 0
    %v141 = vsel %vm91, %v49, 0
    %v144 = vsel %vm91, %v50, 0
    %v147 = vsel %vm91, %v51, 0
    %v150 = vsel %vm91, %v52, 0
    %v153 = vsel %vm91, %v53, 0
    %v156 = vsel %vm91, %v54, 0
    %v159 = vsel %vm91, %v55, 0
    %v162 = vsel %vm91, %v56, 0
    %v165 = vsel %vm91, %v57, 0
    %v168 = vsel %vm91, %v58, 0
    %v171 = vsel %vm91, %v59, 0
    %v174 = vsel %vm91, %v60, 0
    %v177 = vsel %vm91, %v61, 0
    %v180 = vsel %vm91, %v62, 0
    %v183 = vsel %vm91, %v63, 0
    %v186 = vsel %vm91, %v64, 0
    %v189 = vsel %vm91, %v65, 0
    %v192 = vsel %vm91, %v66, 0
    %v195 = vsel %vm91, %v67, 0
    %v198 = vsel %vm91, %v68, 0
    %v201 = vsel %vm91, %v69, 0
    %v204 = vsel %vm91, %v70, 0
    %v207 = vsel %vm91, %v71, 0
    %v210 = vsel %vm91, %v72, 0
    %v213 = vsel %vm91, %v73, 0
    %v216 = vsel %vm91, %v74, 0
    %v219 = vsel %vm91, %v75, 0
    %v222 = vsel %vm91, %v76, 0
    %v225 = vsel %vm91, %v77, 0
    %v228 = vsel %vm91, %v78, 0
    %v231 = vsel %vm91, %v79, 0
    %v234 = vsel %vm91, %v80, 0
    %v237 = vsel %vm91, %v81, 0
    %vm239 = vcmask 1040384
    %v241 = vsel %vm239, %v83, 0
    %243 = vmatprep.subr.mxu0 0.0
    %244 = vmatpush1.msra.mxu0 %v82
    %245 = vmatprep.subr.mxu0 0.0
    %246 = vmatpush1.msra.mxu0 %v241
    %247 = vmatprep.subr.mxu0 0.0
    %248 = vmatpush1.msra.mxu0 0.0
    %249 = vmatprep.subr.mxu0 0.0
    %250 = vmatpush1.msra.mxu0 0.0
    %251 = vmatprep.subr.mxu0 0.0
    %252 = vmatpush1.msra.mxu0 0.0
    %253 = vmatprep.subr.mxu0 0.0
    %254 = vmatpush1.msra.mxu0 0.0
    %255 = vmatprep.subr.mxu0 0.0
    %256 = vmatpush1.msra.mxu0 0.0
    %257 = vmatprep.subr.mxu0 0.0
    %258 = vmatpush1.msra.mxu0 0.0
    %259 = vmatprep.subr.mxu0 0.0
    %260 = vmatpush1.msra.mxu0 0.0
    %261 = vmatprep.subr.mxu0 0.0
    %262 = vmatpush1.msra.mxu0 0.0
    %263 = vmatprep.subr.mxu0 0.0
    %264 = vmatpush1.msra.mxu0 0.0
    %265 = vmatprep.subr.mxu0 0.0
    %266 = vmatpush1.msra.mxu0 0.0
    %267 = vmatprep.subr.mxu0 0.0
    %268 = vmatpush1.msra.mxu0 0.0
    %269 = vmatprep.subr.mxu0 0.0
    %270 = vmatpush1.msra.mxu0 0.0
    %271 = vmatprep.subr.mxu0 0.0
    %272 = vmatpush1.msra.mxu0 0.0
    %273 = vmatprep.subr.mxu0 0.0
    %274 = vmatpush1.msra.mxu0 0.0
    %275 = vmatprep.subr.mxu0 0.0
    %276 = vmatpush1.msra.mxu0 0.0
    %277 = vmatprep.subr.mxu0 0.0
    %278 = vmatpush1.msra.mxu0 0.0
    %279 = vmatprep.subr.mxu0 0.0
    %280 = vmatpush1.msra.mxu0 0.0
    %281 = vmatprep.subr.mxu0 0.0
    %282 = vmatpush1.msra.mxu0 0.0
    %283 = vmatprep.subr.mxu0 0.0
    %284 = vmatpush1.msra.mxu0 0.0
    %285 = vmatprep.subr.mxu0 0.0
    %286 = vmatpush1.msra.mxu0 0.0
    %287 = vmatprep.subr.mxu0 0.0
    %288 = vmatpush1.msra.mxu0 0.0
    %289 = vmatprep.subr.mxu0 0.0
    %290 = vmatpush1.msra.mxu0 0.0
    %291 = vmatprep.subr.mxu0 0.0
    %292 = vmatpush1.msra.mxu0 0.0
    %293 = vmatprep.subr.mxu0 0.0
    %294 = vmatpush1.msra.mxu0 0.0
    %295 = vmatprep.subr.mxu0 0.0
    %296 = vmatpush1.msra.mxu0 0.0
    %297 = vmatprep.subr.mxu0 0.0
    %298 = vmatpush1.msra.mxu0 0.0
    %299 = vmatprep.subr.mxu0 0.0
    %300 = vmatpush1.msra.mxu0 0.0
    %301 = vmatprep.subr.mxu0 0.0
    %302 = vmatpush1.msra.mxu0 0.0
    %303 = vmatprep.subr.mxu0 0.0
    %304 = vmatpush1.msra.mxu0 0.0
    %305 = vmatprep.subr.mxu0 0.0
    %306 = vmatpush1.msra.mxu0 0.0
    %307 = vmatprep.mubr.f32.mxu0 0.0
    %308 = vmatmul.mubr.f32.gmra.mrb[0].mxu0 %v93
    %v309 = vpop.f32.mrb[0].mxu0
    %v310 = vadd.f32 %v89, %v309
    %v311 = vpop.f32.mrb[0].mxu0
    %312 = vmatprep.mubr.f32.mxu0 0.0
    %313 = vmatmul.mubr.f32.gmra.mrb[0].mxu0 %v96
    %v314 = vpop.f32.mrb[0].mxu0
    %v315 = vadd.f32 %v89, %v314
    %v316 = vpop.f32.mrb[0].mxu0
    %317 = vmatprep.mubr.f32.mxu0 0.0
    %318 = vmatmul.mubr.f32.gmra.mrb[0].mxu0 %v99
    %v319 = vpop.f32.mrb[0].mxu0
    %v320 = vadd.f32 %v89, %v319
    %v321 = vpop.f32.mrb[0].mxu0
    %322 = vmatprep.mubr.f32.mxu0 0.0
    %323 = vmatmul.mubr.f32.gmra.mrb[0].mxu0 %v102
    %v324 = vpop.f32.mrb[0].mxu0
    %v325 = vadd.f32 %v89, %v324
    %v326 = vpop.f32.mrb[0].mxu0
    %327 = vmatprep.mubr.f32.mxu0 0.0
    %328 = vmatmul.mubr.f32.gmra.mrb[0].mxu0 %v105
    %v329 = vpop.f32.mrb[0].mxu0
    %v330 = vadd.f32 %v89, %v329
    %v331 = vpop.f32.mrb[0].mxu0
    %332 = vmatprep.mubr.f32.mxu0 0.0
    %333 = vmatmul.mubr.f32.gmra.mrb[0].mxu0 %v108
    %v334 = vpop.f32.mrb[0].mxu0
    %v335 = vadd.f32 %v89, %v334
    %v336 = vpop.f32.mrb[0].mxu0
    %337 = vmatprep.mubr.f32.mxu0 0.0
    %338 = vmatmul.mubr.f32.gmra.mrb[0].mxu0 %v111
    %v339 = vpop.f32.mrb[0].mxu0
    %v340 = vadd.f32 %v89, %v339
    %v341 = vpop.f32.mrb[0].mxu0
    %342 = vmatprep.mubr.f32.mxu0 0.0
    %343 = vmatmul.mubr.f32.gmra.mrb[0].mxu0 %v114
    %v344 = vpop.f32.mrb[0].mxu0
    %v345 = vadd.f32 %v89, %v344
    %v346 = vpop.f32.mrb[0].mxu0
    %347 = vmatprep.mubr.f32.mxu0 0.0
    %348 = vmatmul.mubr.f32.gmra.mrb[0].mxu0 %v117
    %v349 = vpop.f32.mrb[0].mxu0
    %v350 = vadd.f32 %v89, %v349
    %v351 = vpop.f32.mrb[0].mxu0
    %352 = vmatprep.mubr.f32.mxu0 0.0
    %353 = vmatmul.mubr.f32.gmra.mrb[0].mxu0 %v120
    %v354 = vpop.f32.mrb[0].mxu0
    %v355 = vadd.f32 %v89, %v354
    %v356 = vpop.f32.mrb[0].mxu0
    %357 = vmatprep.mubr.f32.mxu0 0.0
    %358 = vmatmul.mubr.f32.gmra.mrb[0].mxu0 %v123
    %v359 = vpop.f32.mrb[0].mxu0
    %v360 = vadd.f32 %v89, %v359
    %v361 = vpop.f32.mrb[0].mxu0
    %362 = vmatprep.mubr.f32.mxu0 0.0
    %363 = vmatmul.mubr.f32.gmra.mrb[0].mxu0 %v126
    %v364 = vpop.f32.mrb[0].mxu0
    %v365 = vadd.f32 %v89, %v364
    %v366 = vpop.f32.mrb[0].mxu0
    %367 = vmatprep.mubr.f32.mxu0 0.0
    %368 = vmatmul.mubr.f32.gmra.mrb[0].mxu0 %v129
    %v369 = vpop.f32.mrb[0].mxu0
    %v370 = vadd.f32 %v89, %v369
    %v371 = vpop.f32.mrb[0].mxu0
    %372 = vmatprep.mubr.f32.mxu0 0.0
    %373 = vmatmul.mubr.f32.gmra.mrb[0].mxu0 %v132
    %v374 = vpop.f32.mrb[0].mxu0
    %v375 = vadd.f32 %v89, %v374
    %v376 = vpop.f32.mrb[0].mxu0
    %377 = vmatprep.mubr.f32.mxu0 0.0
    %378 = vmatmul.mubr.f32.gmra.mrb[0].mxu0 %v135
    %v379 = vpop.f32.mrb[0].mxu0
    %v380 = vadd.f32 %v89, %v379
    %v381 = vpop.f32.mrb[0].mxu0
    %382 = vmatprep.mubr.f32.mxu0 0.0
    %383 = vmatmul.mubr.f32.gmra.mrb[0].mxu0 %v138
    %v384 = vpop.f32.mrb[0].mxu0
    %v385 = vadd.f32 %v89, %v384
    %v386 = vpop.f32.mrb[0].mxu0
    %387 = vmatprep.mubr.f32.mxu0 0.0
    %388 = vmatmul.mubr.f32.gmra.mrb[0].mxu0 %v141
    %v389 = vpop.f32.mrb[0].mxu0
    %v390 = vadd.f32 %v89, %v389
    %v391 = vpop.f32.mrb[0].mxu0
    %392 = vmatprep.mubr.f32.mxu0 0.0
    %393 = vmatmul.mubr.f32.gmra.mrb[0].mxu0 %v144
    %v394 = vpop.f32.mrb[0].mxu0
    %v395 = vadd.f32 %v89, %v394
    %v396 = vpop.f32.mrb[0].mxu0
    %397 = vmatprep.mubr.f32.mxu0 0.0
    %398 = vmatmul.mubr.f32.gmra.mrb[0].mxu0 %v147
    %v399 = vpop.f32.mrb[0].mxu0
    %v400 = vadd.f32 %v89, %v399
    %v401 = vpop.f32.mrb[0].mxu0
    %402 = vmatprep.mubr.f32.mxu0 0.0
    %403 = vmatmul.mubr.f32.gmra.mrb[0].mxu0 %v150
    %v404 = vpop.f32.mrb[0].mxu0
    %v405 = vadd.f32 %v89, %v404
    %v406 = vpop.f32.mrb[0].mxu0
    %407 = vmatprep.mubr.f32.mxu0 0.0
    %408 = vmatmul.mubr.f32.gmra.mrb[0].mxu0 %v153
    %v409 = vpop.f32.mrb[0].mxu0
    %v410 = vadd.f32 %v89, %v409
    %v411 = vpop.f32.mrb[0].mxu0
    %412 = vmatprep.mubr.f32.mxu0 0.0
    %413 = vmatmul.mubr.f32.gmra.mrb[0].mxu0 %v156
    %v414 = vpop.f32.mrb[0].mxu0
    %v415 = vadd.f32 %v89, %v414
    %v416 = vpop.f32.mrb[0].mxu0
    %417 = vmatprep.mubr.f32.mxu0 0.0
    %418 = vmatmul.mubr.f32.gmra.mrb[0].mxu0 %v159
    %v419 = vpop.f32.mrb[0].mxu0
    %v420 = vadd.f32 %v89, %v419
    %v421 = vpop.f32.mrb[0].mxu0
    %422 = vmatprep.mubr.f32.mxu0 0.0
    %423 = vmatmul.mubr.f32.gmra.mrb[0].mxu0 %v162
    %v424 = vpop.f32.mrb[0].mxu0
    %v425 = vadd.f32 %v89, %v424
    %v426 = vpop.f32.mrb[0].mxu0
    %427 = vmatprep.mubr.f32.mxu0 0.0
    %428 = vmatmul.mubr.f32.gmra.mrb[0].mxu0 %v165
    %v429 = vpop.f32.mrb[0].mxu0
    %v430 = vadd.f32 %v89, %v429
    %v431 = vpop.f32.mrb[0].mxu0
    %432 = vmatprep.mubr.f32.mxu0 0.0
    %433 = vmatmul.mubr.f32.gmra.mrb[0].mxu0 %v168
    %v434 = vpop.f32.mrb[0].mxu0
    %v435 = vadd.f32 %v89, %v434
    %v436 = vpop.f32.mrb[0].mxu0
    %437 = vmatprep.mubr.f32.mxu0 0.0
    %438 = vmatmul.mubr.f32.gmra.mrb[0].mxu0 %v171
    %v439 = vpop.f32.mrb[0].mxu0
    %v440 = vadd.f32 %v89, %v439
    %v441 = vpop.f32.mrb[0].mxu0
    %442 = vmatprep.mubr.f32.mxu0 0.0
    %443 = vmatmul.mubr.f32.gmra.mrb[0].mxu0 %v174
    %v444 = vpop.f32.mrb[0].mxu0
    %v445 = vadd.f32 %v89, %v444
    %v446 = vpop.f32.mrb[0].mxu0
    %447 = vmatprep.mubr.f32.mxu0 0.0
    %448 = vmatmul.mubr.f32.gmra.mrb[0].mxu0 %v177
    %v449 = vpop.f32.mrb[0].mxu0
    %v450 = vadd.f32 %v89, %v449
    %v451 = vpop.f32.mrb[0].mxu0
    %452 = vmatprep.mubr.f32.mxu0 0.0
    %453 = vmatmul.mubr.f32.gmra.mrb[0].mxu0 %v180
    %v454 = vpop.f32.mrb[0].mxu0
    %v455 = vadd.f32 %v89, %v454
    %v456 = vpop.f32.mrb[0].mxu0
    %457 = vmatprep.mubr.f32.mxu0 0.0
    %458 = vmatmul.mubr.f32.gmra.mrb[0].mxu0 %v183
    %v459 = vpop.f32.mrb[0].mxu0
    %v460 = vadd.f32 %v89, %v459
    %v461 = vpop.f32.mrb[0].mxu0
    %462 = vmatprep.mubr.f32.mxu0 0.0
    %463 = vmatmul.mubr.f32.gmra.mrb[0].mxu0 %v186
    %v464 = vpop.f32.mrb[0].mxu0
    %v465 = vadd.f32 %v89, %v464
    %v466 = vpop.f32.mrb[0].mxu0
    %467 = vmatprep.mubr.f32.mxu0 0.0
    %468 = vmatmul.mubr.f32.gmra.mrb[0].mxu0 %v189
    %v469 = vpop.f32.mrb[0].mxu0
    %v470 = vadd.f32 %v89, %v469
    %v471 = vpop.f32.mrb[0].mxu0
    %472 = vmatprep.mubr.f32.mxu0 0.0
    %473 = vmatmul.mubr.f32.gmra.mrb[0].mxu0 %v192
    %v474 = vpop.f32.mrb[0].mxu0
    %v475 = vadd.f32 %v89, %v474
    %v476 = vpop.f32.mrb[0].mxu0
    %477 = vmatprep.mubr.f32.mxu0 0.0
    %478 = vmatmul.mubr.f32.gmra.mrb[0].mxu0 %v195
    %v479 = vpop.f32.mrb[0].mxu0
    %v480 = vadd.f32 %v89, %v479
    %v481 = vpop.f32.mrb[0].mxu0
    %482 = vmatprep.mubr.f32.mxu0 0.0
    %483 = vmatmul.mubr.f32.gmra.mrb[0].mxu0 %v198
    %v484 = vpop.f32.mrb[0].mxu0
    %v485 = vadd.f32 %v89, %v484
    %v486 = vpop.f32.mrb[0].mxu0
    %487 = vmatprep.mubr.f32.mxu0 0.0
    %488 = vmatmul.mubr.f32.gmra.mrb[0].mxu0 %v201
    %v489 = vpop.f32.mrb[0].mxu0
    %v490 = vadd.f32 %v89, %v489
    %v491 = vpop.f32.mrb[0].mxu0
    %492 = vmatprep.mubr.f32.mxu0 0.0
    %493 = vmatmul.mubr.f32.gmra.mrb[0].mxu0 %v204
    %v494 = vpop.f32.mrb[0].mxu0
    %v495 = vadd.f32 %v89, %v494
    %v496 = vpop.f32.mrb[0].mxu0
    %497 = vmatprep.mubr.f32.mxu0 0.0
    %498 = vmatmul.mubr.f32.gmra.mrb[0].mxu0 %v207
    %v499 = vpop.f32.mrb[0].mxu0
    %v500 = vadd.f32 %v89, %v499
    %v501 = vpop.f32.mrb[0].mxu0
    %502 = vmatprep.mubr.f32.mxu0 0.0
    %503 = vmatmul.mubr.f32.gmra.mrb[0].mxu0 %v210
    %v504 = vpop.f32.mrb[0].mxu0
    %v505 = vadd.f32 %v89, %v504
    %v506 = vpop.f32.mrb[0].mxu0
    %507 = vmatprep.mubr.f32.mxu0 0.0
    %508 = vmatmul.mubr.f32.gmra.mrb[0].mxu0 %v213
    %v509 = vpop.f32.mrb[0].mxu0
    %v510 = vadd.f32 %v89, %v509
    %v511 = vpop.f32.mrb[0].mxu0
    %512 = vmatprep.mubr.f32.mxu0 0.0
    %513 = vmatmul.mubr.f32.gmra.mrb[0].mxu0 %v216
    %v514 = vpop.f32.mrb[0].mxu0
    %v515 = vadd.f32 %v89, %v514
    %v516 = vpop.f32.mrb[0].mxu0
    %517 = vmatprep.mubr.f32.mxu0 0.0
    %518 = vmatmul.mubr.f32.gmra.mrb[0].mxu0 %v219
    %v519 = vpop.f32.mrb[0].mxu0
    %v520 = vadd.f32 %v89, %v519
    %v521 = vpop.f32.mrb[0].mxu0
    %522 = vmatprep.mubr.f32.mxu0 0.0
    %523 = vmatmul.mubr.f32.gmra.mrb[0].mxu0 %v222
    %v524 = vpop.f32.mrb[0].mxu0
    %v525 = vadd.f32 %v89, %v524
    %v526 = vpop.f32.mrb[0].mxu0
    %527 = vmatprep.mubr.f32.mxu0 0.0
    %528 = vmatmul.mubr.f32.gmra.mrb[0].mxu0 %v225
    %v529 = vpop.f32.mrb[0].mxu0
    %v530 = vadd.f32 %v89, %v529
    %v531 = vpop.f32.mrb[0].mxu0
    %532 = vmatprep.mubr.f32.mxu0 0.0
    %533 = vmatmul.mubr.f32.gmra.mrb[0].mxu0 %v228
    %v534 = vpop.f32.mrb[0].mxu0
    %v535 = vadd.f32 %v89, %v534
    %v536 = vpop.f32.mrb[0].mxu0
    %537 = vmatprep.mubr.f32.mxu0 0.0
    %538 = vmatmul.mubr.f32.gmra.mrb[0].mxu0 %v231
    %v539 = vpop.f32.mrb[0].mxu0
    %v540 = vadd.f32 %v89, %v539
    %v541 = vpop.f32.mrb[0].mxu0
    %542 = vmatprep.mubr.f32.mxu0 0.0
    %543 = vmatmul.mubr.f32.gmra.mrb[0].mxu0 %v234
    %v544 = vpop.f32.mrb[0].mxu0
    %v545 = vadd.f32 %v89, %v544
    %v546 = vpop.f32.mrb[0].mxu0
    %547 = vmatprep.mubr.f32.mxu0 0.0
    %548 = vmatmul.mubr.f32.gmra.mrb[0].mxu0 %v237
    %v549 = vpop.f32.mrb[0].mxu0
    %v550 = vadd.f32 %v89, %v549
    %v551 = vpop.f32.mrb[0].mxu0
    %552 = vdwg.mxu0
    %v553 = vmax.f32 %v310, 0.0
    %v554 = vmax.f32 %v315, 0.0
    %v555 = vmax.f32 %v320, 0.0
    %v556 = vmax.f32 %v325, 0.0
    %v557 = vmax.f32 %v330, 0.0
    %v558 = vmax.f32 %v335, 0.0
    %v559 = vmax.f32 %v340, 0.0
    %v560 = vmax.f32 %v345, 0.0
    %v561 = vmax.f32 %v350, 0.0
    %v562 = vmax.f32 %v355, 0.0
    %v563 = vmax.f32 %v360, 0.0
    %v564 = vmax.f32 %v365, 0.0
    %v565 = vmax.f32 %v370, 0.0
    %v566 = vmax.f32 %v375, 0.0
    %v567 = vmax.f32 %v380, 0.0
    %v568 = vmax.f32 %v385, 0.0
    %v569 = vmax.f32 %v390, 0.0
    %v570 = vmax.f32 %v395, 0.0
    %v571 = vmax.f32 %v400, 0.0
    %v572 = vmax.f32 %v405, 0.0
    %v573 = vmax.f32 %v410, 0.0
    %v574 = vmax.f32 %v415, 0.0
    %v575 = vmax.f32 %v420, 0.0
    %v576 = vmax.f32 %v425, 0.0
    %v577 = vmax.f32 %v430, 0.0
    %v578 = vmax.f32 %v435, 0.0
    %v579 = vmax.f32 %v440, 0.0
    %v580 = vmax.f32 %v445, 0.0
    %v581 = vmax.f32 %v450, 0.0
    %v582 = vmax.f32 %v455, 0.0
    %v583 = vmax.f32 %v460, 0.0
    %v584 = vmax.f32 %v465, 0.0
    %v585 = vmax.f32 %v470, 0.0
    %v586 = vmax.f32 %v475, 0.0
    %v587 = vmax.f32 %v480, 0.0
    %v588 = vmax.f32 %v485, 0.0
    %v589 = vmax.f32 %v490, 0.0
    %v590 = vmax.f32 %v495, 0.0
    %v591 = vmax.f32 %v500, 0.0
    %v592 = vmax.f32 %v505, 0.0
    %v593 = vmax.f32 %v510, 0.0
    %v594 = vmax.f32 %v515, 0.0
    %v595 = vmax.f32 %v520, 0.0
    %v596 = vmax.f32 %v525, 0.0
    %v597 = vmax.f32 %v530, 0.0
    %v598 = vmax.f32 %v535, 0.0
    %v599 = vmax.f32 %v540, 0.0
    %v600 = vmax.f32 %v545, 0.0
    %v601 = vmax.f32 %v550, 0.0
    %vm627 = vcmask 1043456
    %v628 = vrot.slane %v577, 4
    %v629 = vrot.slane %v578, 4
    %v630 = vsel %vm627, %v628, %v629
    %v631 = vrot.slane %v579, 4
    %v632 = vsel %vm627, %v629, %v631
    %v633 = vrot.slane %v580, 4
    %v634 = vsel %vm627, %v631, %v633
    %v635 = vrot.slane %v581, 4
    %v636 = vsel %vm627, %v633, %v635
    %v637 = vrot.slane %v582, 4
    %v638 = vsel %vm627, %v635, %v637
    %v639 = vrot.slane %v583, 4
    %v640 = vsel %vm627, %v637, %v639
    %v641 = vrot.slane %v584, 4
    %v642 = vsel %vm627, %v639, %v641
    %v643 = vrot.slane %v585, 4
    %v644 = vsel %vm627, %v641, %v643
    %v645 = vrot.slane %v586, 4
    %v646 = vsel %vm627, %v643, %v645
    %v647 = vrot.slane %v587, 4
    %v648 = vsel %vm627, %v645, %v647
    %v649 = vrot.slane %v588, 4
    %v650 = vsel %vm627, %v647, %v649
    %v651 = vrot.slane %v589, 4
    %v652 = vsel %vm627, %v649, %v651
    %v653 = vrot.slane %v590, 4
    %v654 = vsel %vm627, %v651, %v653
    %v655 = vrot.slane %v591, 4
    %v656 = vsel %vm627, %v653, %v655
    %v657 = vrot.slane %v592, 4
    %v658 = vsel %vm627, %v655, %v657
    %v659 = vrot.slane %v593, 4
    %v660 = vsel %vm627, %v657, %v659
    %v661 = vrot.slane %v594, 4
    %v662 = vsel %vm627, %v659, %v661
    %v663 = vrot.slane %v595, 4
    %v664 = vsel %vm627, %v661, %v663
    %v665 = vrot.slane %v596, 4
    %v666 = vsel %vm627, %v663, %v665
    %v667 = vrot.slane %v597, 4
    %v668 = vsel %vm627, %v665, %v667
    %v669 = vrot.slane %v598, 4
    %v670 = vsel %vm627, %v667, %v669
    %v671 = vrot.slane %v599, 4
    %v672 = vsel %vm627, %v669, %v671
    %v673 = vrot.slane %v600, 4
    %v674 = vsel %vm627, %v671, %v673
    %v675 = vrot.slane %v601, 4
    %v676 = vsel %vm627, %v673, %v675
    %v702 = vmax.f32 %v553, %v630
    %v703 = vmax.f32 %v554, %v632
    %v704 = vmax.f32 %v555, %v634
    %v705 = vmax.f32 %v556, %v636
    %v706 = vmax.f32 %v557, %v638
    %v707 = vmax.f32 %v558, %v640
    %v708 = vmax.f32 %v559, %v642
    %v709 = vmax.f32 %v560, %v644
    %v710 = vmax.f32 %v561, %v646
    %v711 = vmax.f32 %v562, %v648
    %v712 = vmax.f32 %v563, %v650
    %v713 = vmax.f32 %v564, %v652
    %v714 = vmax.f32 %v565, %v654
    %v715 = vmax.f32 %v566, %v656
    %v716 = vmax.f32 %v567, %v658
    %v717 = vmax.f32 %v568, %v660
    %v718 = vmax.f32 %v569, %v662
    %v719 = vmax.f32 %v570, %v664
    %v720 = vmax.f32 %v571, %v666
    %v721 = vmax.f32 %v572, %v668
    %v722 = vmax.f32 %v573, %v670
    %v723 = vmax.f32 %v574, %v672
    %v724 = vmax.f32 %v575, %v674
    %v725 = vmax.f32 %v576, %v676
    %v726 = vmax.f32 %v577, %v675
    %vm740 = vcmask 1045504
    %v741 = vrot.slane %v714, 2
    %v742 = vrot.slane %v715, 2
    %v743 = vsel %vm740, %v741, %v742
    %v744 = vrot.slane %v716, 2
    %v745 = vsel %vm740, %v742, %v744
    %v746 = vrot.slane %v717, 2
    %v747 = vsel %vm740, %v744, %v746
    %v748 = vrot.slane %v718, 2
    %v749 = vsel %vm740, %v746, %v748
    %v750 = vrot.slane %v719, 2
    %v751 = vsel %vm740, %v748, %v750
    %v752 = vrot.slane %v720, 2
    %v753 = vsel %vm740, %v750, %v752
    %v754 = vrot.slane %v721, 2
    %v755 = vsel %vm740, %v752, %v754
    %v756 = vrot.slane %v722, 2
    %v757 = vsel %vm740, %v754, %v756
    %v758 = vrot.slane %v723, 2
    %v759 = vsel %vm740, %v756, %v758
    %v760 = vrot.slane %v724, 2
    %v761 = vsel %vm740, %v758, %v760
    %v762 = vrot.slane %v725, 2
    %v763 = vsel %vm740, %v760, %v762
    %v764 = vrot.slane %v726, 2
    %v765 = vsel %vm740, %v762, %v764
    %v778 = vmax.f32 %v702, %v743
    %v779 = vmax.f32 %v703, %v745
    %v780 = vmax.f32 %v704, %v747
    %v781 = vmax.f32 %v705, %v749
    %v782 = vmax.f32 %v706, %v751
    %v783 = vmax.f32 %v707, %v753
    %v784 = vmax.f32 %v708, %v755
    %v785 = vmax.f32 %v709, %v757
    %v786 = vmax.f32 %v710, %v759
    %v787 = vmax.f32 %v711, %v761
    %v788 = vmax.f32 %v712, %v763
    %v789 = vmax.f32 %v713, %v765
    %v792 = vrot.slane %v779, 2
    %v793 = vrot.slane %v780, 2
    %v794 = vsel %vm740, %v792, %v793
    %v797 = vrot.slane %v784, 1
    %vm801 = vcmask 1044480
    %v802 = vrot.slane %v785, 3
    %v803 = vrot.slane %v786, 3
    %v804 = vsel %vm801, %v802, %v803
    %v807 = vrot.slane %v778, 7
    %v808 = vrot.slane %v779, 7
    %v809 = vsel %vm239, %v807, %v808
    %vm812 = vcmask 1046528
    %v813 = vrot.slane %v780, 1
    %v814 = vrot.slane %v781, 1
    %v815 = vsel %vm812, %v813, %v814
    %v818 = vrot.slane %v786, 2
    %v819 = vrot.slane %v787, 2
    %v820 = vsel %vm740, %v818, %v819
    %v822 = vsel %vm627, %v778, %v794
    %v823 = vsel %vm627, %v797, %v804
    %v824 = vsel %vm627, %v809, %v815
    %v825 = vsel %vm627, %v785, %v820
    %v826 = vld [vmem:[%s3] sm:$0xff]
    %v827 = vld [vmem:[%s3 + $0x8] sm:$0xff]
    %v828 = vld [vmem:[%s3 + $0x10] sm:$0xff]
    %v829 = vld [vmem:[%s3 + $0x18] sm:$0xff]
    %v830 = vrot.slane %v778, 1
    %v832 = vrot.slane %v779, 3
    %v833 = vrot.slane %v780, 3
    %v834 = vsel %vm801, %v832, %v833
    %v836 = vrot.slane %v784, 2
    %v838 = vrot.slane %v786, 4
    %v840 = vrot.slane %v781, 2
    %v841 = vsel %vm740, %v793, %v840
    %v843 = vrot.slane %v785, 1
    %v845 = vrot.slane %v787, 3
    %v846 = vsel %vm801, %v803, %v845
    %v848 = vsel %vm627, %v830, %v834
    %v849 = vsel %vm627, %v836, %v838
    %v850 = vsel %vm627, %v779, %v841
    %v851 = vsel %vm627, %v843, %v846
    %s852 = scalar_lea.vmem %s3, 32
    %v853 = vld [vmem:[%s852] sm:$0xff]
    %v854 = vld [vmem:[%s852 + $0x8] sm:$0xff]
    %v855 = vld [vmem:[%s852 + $0x10] sm:$0xff]
    %v856 = vld [vmem:[%s852 + $0x18] sm:$0xff]
    %vm857 = vcmask 261120
    %v859 = vsel %vm857, %v848, 0
    %v862 = vsel %vm857, %v849, 0
    %v865 = vsel %vm857, %v850, 0
    %v868 = vsel %vm857, %v851, 0
    %870 = vmatprep.subr.mxu0 0.0
    %871 = vmatpush1.msra.mxu0 %v853
    %872 = vmatprep.subr.mxu0 0.0
    %873 = vmatpush1.msra.mxu0 %v854
    %874 = vmatprep.subr.mxu0 0.0
    %875 = vmatpush1.msra.mxu0 %v855
    %876 = vmatprep.subr.mxu0 0.0
    %877 = vmatpush1.msra.mxu0 %v856
    %878 = vmatprep.subr.mxu0 0.0
    %879 = vmatpush1.msra.mxu0 0.0
    %880 = vmatprep.subr.mxu0 0.0
    %881 = vmatpush1.msra.mxu0 0.0
    %882 = vmatprep.subr.mxu0 0.0
    %883 = vmatpush1.msra.mxu0 0.0
    %884 = vmatprep.subr.mxu0 0.0
    %885 = vmatpush1.msra.mxu0 0.0
    %886 = vmatprep.subr.mxu0 0.0
    %887 = vmatpush1.msra.mxu0 0.0
    %888 = vmatprep.subr.mxu0 0.0
    %889 = vmatpush1.msra.mxu0 0.0
    %890 = vmatprep.subr.mxu0 0.0
    %891 = vmatpush1.msra.mxu0 0.0
    %892 = vmatprep.subr.mxu0 0.0
    %893 = vmatpush1.msra.mxu0 0.0
    %894 = vmatprep.subr.mxu0 0.0
    %895 = vmatpush1.msra.mxu0 0.0
    %896 = vmatprep.subr.mxu0 0.0
    %897 = vmatpush1.msra.mxu0 0.0
    %898 = vmatprep.subr.mxu0 0.0
    %899 = vmatpush1.msra.mxu0 0.0
    %900 = vmatprep.subr.mxu0 0.0
    %901 = vmatpush1.msra.mxu0 0.0
    %902 = vmatprep.subr.mxu0 0.0
    %903 = vmatpush1.msra.mxu0 0.0
    %904 = vmatprep.subr.mxu0 0.0
    %905 = vmatpush1.msra.mxu0 0.0
    %906 = vmatprep.subr.mxu0 0.0
    %907 = vmatpush1.msra.mxu0 0.0
    %908 = vmatprep.subr.mxu0 0.0
    %909 = vmatpush1.msra.mxu0 0.0
    %910 = vmatprep.subr.mxu0 0.0
    %911 = vmatpush1.msra.mxu0 0.0
    %912 = vmatprep.subr.mxu0 0.0
    %913 = vmatpush1.msra.mxu0 0.0
    %914 = vmatprep.subr.mxu0 0.0
    %915 = vmatpush1.msra.mxu0 0.0
    %916 = vmatprep.subr.mxu0 0.0
    %917 = vmatpush1.msra.mxu0 0.0
    %918 = vmatprep.subr.mxu0 0.0
    %919 = vmatpush1.msra.mxu0 0.0
    %920 = vmatprep.subr.mxu0 0.0
    %921 = vmatpush1.msra.mxu0 0.0
    %922 = vmatprep.subr.mxu0 0.0
    %923 = vmatpush1.msra.mxu0 0.0
    %924 = vmatprep.subr.mxu0 0.0
    %925 = vmatpush1.msra.mxu0 0.0
    %926 = vmatprep.subr.mxu0 0.0
    %927 = vmatpush1.msra.mxu0 0.0
    %928 = vmatprep.subr.mxu0 0.0
    %929 = vmatpush1.msra.mxu0 0.0
    %930 = vmatprep.subr.mxu0 0.0
    %931 = vmatpush1.msra.mxu0 0.0
    %932 = vmatprep.subr.mxu0 0.0
    %933 = vmatpush1.msra.mxu0 0.0
    %934 = vmatprep.mubr.f32.mxu0 0.0
    %935 = vmatmul.mubr.f32.gmra.mrb[0].mxu0 %v859
    %v936 = vpop.f32.mrb[0].mxu0
    %v937 = vadd.f32 0.0, %v936
    %v938 = vpop.f32.mrb[0].mxu0
    %939 = vmatprep.mubr.f32.mxu0 0.0
    %940 = vmatmul.mubr.f32.gmra.mrb[0].mxu0 %v862
    %v941 = vpop.f32.mrb[0].mxu0
    %v942 = vadd.f32 0.0, %v941
    %v943 = vpop.f32.mrb[0].mxu0
    %944 = vmatprep.mubr.f32.mxu0 0.0
    %945 = vmatmul.mubr.f32.gmra.mrb[0].mxu0 %v865
    %v946 = vpop.f32.mrb[0].mxu0
    %v947 = vadd.f32 0.0, %v946
    %v948 = vpop.f32.mrb[0].mxu0
    %949 = vmatprep.mubr.f32.mxu0 0.0
    %950 = vmatmul.mubr.f32.gmra.mrb[0].mxu0 %v868
    %v951 = vpop.f32.mrb[0].mxu0
    %v952 = vadd.f32 0.0, %v951
    %v953 = vpop.f32.mrb[0].mxu0
    %954 = vdwg.mxu0
    %v956 = vsel %vm857, %v822, 0
    %v959 = vsel %vm857, %v823, 0
    %v962 = vsel %vm857, %v824, 0
    %v965 = vsel %vm857, %v825, 0
    %967 = vmatprep.subr.mxu0 0.0
    %968 = vmatpush1.msra.mxu0 %v826
    %969 = vmatprep.subr.mxu0 0.0
    %970 = vmatpush1.msra.mxu0 %v827
    %971 = vmatprep.subr.mxu0 0.0
    %972 = vmatpush1.msra.mxu0 %v828
    %973 = vmatprep.subr.mxu0 0.0
    %974 = vmatpush1.msra.mxu0 %v829
    %975 = vmatprep.subr.mxu0 0.0
    %976 = vmatpush1.msra.mxu0 0.0
    %977 = vmatprep.subr.mxu0 0.0
    %978 = vmatpush1.msra.mxu0 0.0
    %979 = vmatprep.subr.mxu0 0.0
    %980 = vmatpush1.msra.mxu0 0.0
    %981 = vmatprep.subr.mxu0 0.0
    %982 = vmatpush1.msra.mxu0 0.0
    %983 = vmatprep.subr.mxu0 0.0
    %984 = vmatpush1.msra.mxu0 0.0
    %985 = vmatprep.subr.mxu0 0.0
    %986 = vmatpush1.msra.mxu0 0.0
    %987 = vmatprep.subr.mxu0 0.0
    %988 = vmatpush1.msra.mxu0 0.0
    %989 = vmatprep.subr.mxu0 0.0
    %990 = vmatpush1.msra.mxu0 0.0
    %991 = vmatprep.subr.mxu0 0.0
    %992 = vmatpush1.msra.mxu0 0.0
    %993 = vmatprep.subr.mxu0 0.0
    %994 = vmatpush1.msra.mxu0 0.0
    %995 = vmatprep.subr.mxu0 0.0
    %996 = vmatpush1.msra.mxu0 0.0
    %997 = vmatprep.subr.mxu0 0.0
    %998 = vmatpush1.msra.mxu0 0.0
    %999 = vmatprep.subr.mxu0 0.0
    %1000 = vmatpush1.msra.mxu0 0.0
    %1001 = vmatprep.subr.mxu0 0.0
    %1002 = vmatpush1.msra.mxu0 0.0
    %1003 = vmatprep.subr.mxu0 0.0
    %1004 = vmatpush1.msra.mxu0 0.0
    %1005 = vmatprep.subr.mxu0 0.0
    %1006 = vmatpush1.msra.mxu0 0.0
    %1007 = vmatprep.subr.mxu0 0.0
    %1008 = vmatpush1.msra.mxu0 0.0
    %1009 = vmatprep.subr.mxu0 0.0
    %1010 = vmatpush1.msra.mxu0 0.0
    %1011 = vmatprep.subr.mxu0 0.0
    %1012 = vmatpush1.msra.mxu0 0.0
    %1013 = vmatprep.subr.mxu0 0.0
    %1014 = vmatpush1.msra.mxu0 0.0
    %1015 = vmatprep.subr.mxu0 0.0
    %1016 = vmatpush1.msra.mxu0 0.0
    %1017 = vmatprep.subr.mxu0 0.0
    %1018 = vmatpush1.msra.mxu0 0.0
    %1019 = vmatprep.subr.mxu0 0.0
    %1020 = vmatpush1.msra.mxu0 0.0
    %1021 = vmatprep.subr.mxu0 0.0
    %1022 = vmatpush1.msra.mxu0 0.0
    %1023 = vmatprep.subr.mxu0 0.0
    %1024 = vmatpush1.msra.mxu0 0.0
    %1025 = vmatprep.subr.mxu0 0.0
    %1026 = vmatpush1.msra.mxu0 0.0
    %1027 = vmatprep.subr.mxu0 0.0
    %1028 = vmatpush1.msra.mxu0 0.0
    %1029 = vmatprep.subr.mxu0 0.0
    %1030 = vmatpush1.msra.mxu0 0.0
    %1031 = vmatprep.mubr.f32.mxu0 0.0
    %1032 = vmatmul.mubr.f32.gmra.mrb[0].mxu0 %v956
    %v1033 = vpop.f32.mrb[0].mxu0
    %v1034 = vadd.f32 %v937, %v1033
    %v1035 = vpop.f32.mrb[0].mxu0
    %1036 = vmatprep.mubr.f32.mxu0 0.0
    %1037 = vmatmul.mubr.f32.gmra.mrb[0].mxu0 %v959
    %v1038 = vpop.f32.mrb[0].mxu0
    %v1039 = vadd.f32 %v942, %v1038
    %v1040 = vpop.f32.mrb[0].mxu0
    %1041 = vmatprep.mubr.f32.mxu0 0.0
    %1042 = vmatmul.mubr.f32.gmra.mrb[0].mxu0 %v962
    %v1043 = vpop.f32.mrb[0].mxu0
    %v1044 = vadd.f32 %v947, %v1043
    %v1045 = vpop.f32.mrb[0].mxu0
    %1046 = vmatprep.mubr.f32.mxu0 0.0
    %1047 = vmatmul.mubr.f32.gmra.mrb[0].mxu0 %v965
    %v1048 = vpop.f32.mrb[0].mxu0
    %v1049 = vadd.f32 %v952, %v1048
    %v1050 = vpop.f32.mrb[0].mxu0
    %1051 = vdwg.mxu0
    %v1052 = vrot.slane %v778, 2
    %v1054 = vrot.slane %v780, 4
    %v1056 = vrot.slane %v784, 3
    %v1058 = vrot.slane %v786, 5
    %v1060 = vrot.slane %v779, 1
    %v1062 = vrot.slane %v781, 3
    %v1063 = vsel %vm801, %v833, %v1062
    %v1065 = vrot.slane %v785, 2
    %v1067 = vrot.slane %v787, 4
    %v1069 = vsel %vm627, %v1052, %v1054
    %v1070 = vsel %vm627, %v1056, %v1058
    %v1071 = vsel %vm627, %v1060, %v1063
    %v1072 = vsel %vm627, %v1065, %v1067
    %s1073 = scalar_lea.vmem %s3, 64
    %v1074 = vld [vmem:[%s1073] sm:$0xff]
    %v1075 = vld [vmem:[%s1073 + $0x8] sm:$0xff]
    %v1076 = vld [vmem:[%s1073 + $0x10] sm:$0xff]
    %v1077 = vld [vmem:[%s1073 + $0x18] sm:$0xff]
    %v1079 = vsel %vm857, %v1069, 0
    %v1082 = vsel %vm857, %v1070, 0
    %v1085 = vsel %vm857, %v1071, 0
    %v1088 = vsel %vm857, %v1072, 0
    %1090 = vmatprep.subr.mxu0 0.0
    %1091 = vmatpush1.msra.mxu0 %v1074
    %1092 = vmatprep.subr.mxu0 0.0
    %1093 = vmatpush1.msra.mxu0 %v1075
    %1094 = vmatprep.subr.mxu0 0.0
    %1095 = vmatpush1.msra.mxu0 %v1076
    %1096 = vmatprep.subr.mxu0 0.0
    %1097 = vmatpush1.msra.mxu0 %v1077
    %1098 = vmatprep.subr.mxu0 0.0
    %1099 = vmatpush1.msra.mxu0 0.0
    %1100 = vmatprep.subr.mxu0 0.0
    %1101 = vmatpush1.msra.mxu0 0.0
    %1102 = vmatprep.subr.mxu0 0.0
    %1103 = vmatpush1.msra.mxu0 0.0
    %1104 = vmatprep.subr.mxu0 0.0
    %1105 = vmatpush1.msra.mxu0 0.0
    %1106 = vmatprep.subr.mxu0 0.0
    %1107 = vmatpush1.msra.mxu0 0.0
    %1108 = vmatprep.subr.mxu0 0.0
    %1109 = vmatpush1.msra.mxu0 0.0
    %1110 = vmatprep.subr.mxu0 0.0
    %1111 = vmatpush1.msra.mxu0 0.0
    %1112 = vmatprep.subr.mxu0 0.0
    %1113 = vmatpush1.msra.mxu0 0.0
    %1114 = vmatprep.subr.mxu0 0.0
    %1115 = vmatpush1.msra.mxu0 0.0
    %1116 = vmatprep.subr.mxu0 0.0
    %1117 = vmatpush1.msra.mxu0 0.0
    %1118 = vmatprep.subr.mxu0 0.0
    %1119 = vmatpush1.msra.mxu0 0.0
    %1120 = vmatprep.subr.mxu0 0.0
    %1121 = vmatpush1.msra.mxu0 0.0
    %1122 = vmatprep.subr.mxu0 0.0
    %1123 = vmatpush1.msra.mxu0 0.0
    %1124 = vmatprep.subr.mxu0 0.0
    %1125 = vmatpush1.msra.mxu0 0.0
    %1126 = vmatprep.subr.mxu0 0.0
    %1127 = vmatpush1.msra.mxu0 0.0
    %1128 = vmatprep.subr.mxu0 0.0
    %1129 = vmatpush1.msra.mxu0 0.0
    %1130 = vmatprep.subr.mxu0 0.0
    %1131 = vmatpush1.msra.mxu0 0.0
    %1132 = vmatprep.subr.mxu0 0.0
    %1133 = vmatpush1.msra.mxu0 0.0
    %1134 = vmatprep.subr.mxu0 0.0
    %1135 = vmatpush1.msra.mxu0 0.0
    %1136 = vmatprep.subr.mxu0 0.0
    %1137 = vmatpush1.msra.mxu0 0.0
    %1138 = vmatprep.subr.mxu0 0.0
    %1139 = vmatpush1.msra.mxu0 0.0
    %1140 = vmatprep.subr.mxu0 0.0
    %1141 = vmatpush1.msra.mxu0 0.0
    %1142 = vmatprep.subr.mxu0 0.0
    %1143 = vmatpush1.msra.mxu0 0.0
    %1144 = vmatprep.subr.mxu0 0.0
    %1145 = vmatpush1.msra.mxu0 0.0
    %1146 = vmatprep.subr.mxu0 0.0
    %1147 = vmatpush1.msra.mxu0 0.0
    %1148 = vmatprep.subr.mxu0 0.0
    %1149 = vmatpush1.msra.mxu0 0.0
    %1150 = vmatprep.subr.mxu0 0.0
    %1151 = vmatpush1.msra.mxu0 0.0
    %1152 = vmatprep.subr.mxu0 0.0
    %1153 = vmatpush1.msra.mxu0 0.0
    %1154 = vmatprep.mubr.f32.mxu0 0.0
    %1155 = vmatmul.mubr.f32.gmra.mrb[0].mxu0 %v1079
    %v1156 = vpop.f32.mrb[0].mxu0
    %v1157 = vadd.f32 0.0, %v1156
    %v1158 = vpop.f32.mrb[0].mxu0
    %1159 = vmatprep.mubr.f32.mxu0 0.0
    %1160 = vmatmul.mubr.f32.gmra.mrb[0].mxu0 %v1082
    %v1161 = vpop.f32.mrb[0].mxu0
    %v1162 = vadd.f32 0.0, %v1161
    %v1163 = vpop.f32.mrb[0].mxu0
    %1164 = vmatprep.mubr.f32.mxu0 0.0
    %1165 = vmatmul.mubr.f32.gmra.mrb[0].mxu0 %v1085
    %v1166 = vpop.f32.mrb[0].mxu0
    %v1167 = vadd.f32 0.0, %v1166
    %v1168 = vpop.f32.mrb[0].mxu0
    %1169 = vmatprep.mubr.f32.mxu0 0.0
    %1170 = vmatmul.mubr.f32.gmra.mrb[0].mxu0 %v1088
    %v1171 = vpop.f32.mrb[0].mxu0
    %v1172 = vadd.f32 0.0, %v1171
    %v1173 = vpop.f32.mrb[0].mxu0
    %1174 = vdwg.mxu0
    %v1175 = vadd.f32 %v1034, %v1157
    %v1176 = vadd.f32 %v1039, %v1162
    %v1177 = vadd.f32 %v1044, %v1167
    %v1178 = vadd.f32 %v1049, %v1172
    %vm1179 = vcmask 1041408
    %v1180 = vrot.slane %v779, 6
    %v1181 = vrot.slane %v780, 6
    %v1182 = vsel %vm1179, %v1180, %v1181
    %v1184 = vrot.slane %v785, 7
    %v1185 = vrot.slane %v786, 7
    %v1186 = vsel %vm239, %v1184, %v1185
    %v1189 = vrot.slane %v787, 1
    %v1190 = vrot.slane %v788, 1
    %v1191 = vsel %vm812, %v1189, %v1190
    %v1193 = vsel %vm627, %v1182, %v781
    %v1194 = vsel %vm627, %v1186, %v1191
    %s1195 = scalar_lea.vmem %s3, 96
    %v1196 = vld [vmem:[%s1195] sm:$0xff]
    %v1197 = vld [vmem:[%s1195 + $0x8] sm:$0xff]
    %v1198 = vld [vmem:[%s1195 + $0x10] sm:$0xff]
    %v1199 = vld [vmem:[%s1195 + $0x18] sm:$0xff]
    %v1201 = vsel %vm857, %v1193, 0
    %v1204 = vsel %vm857, %v1194, 0
    %1206 = vmatprep.subr.mxu0 0.0
    %1207 = vmatpush1.msra.mxu0 %v1196
    %1208 = vmatprep.subr.mxu0 0.0
    %1209 = vmatpush1.msra.mxu0 %v1197
    %1210 = vmatprep.subr.mxu0 0.0
    %1211 = vmatpush1.msra.mxu0 %v1198
    %1212 = vmatprep.subr.mxu0 0.0
    %1213 = vmatpush1.msra.mxu0 %v1199
    %1214 = vmatprep.subr.mxu0 0.0
    %1215 = vmatpush1.msra.mxu0 0.0
    %1216 = vmatprep.subr.mxu0 0.0
    %1217 = vmatpush1.msra.mxu0 0.0
    %1218 = vmatprep.subr.mxu0 0.0
    %1219 = vmatpush1.msra.mxu0 0.0
    %1220 = vmatprep.subr.mxu0 0.0
    %1221 = vmatpush1.msra.mxu0 0.0
    %1222 = vmatprep.subr.mxu0 0.0
    %1223 = vmatpush1.msra.mxu0 0.0
    %1224 = vmatprep.subr.mxu0 0.0
    %1225 = vmatpush1.msra.mxu0 0.0
    %1226 = vmatprep.subr.mxu0 0.0
    %1227 = vmatpush1.msra.mxu0 0.0
    %1228 = vmatprep.subr.mxu0 0.0
    %1229 = vmatpush1.msra.mxu0 0.0
    %1230 = vmatprep.subr.mxu0 0.0
    %1231 = vmatpush1.msra.mxu0 0.0
    %1232 = vmatprep.subr.mxu0 0.0
    %1233 = vmatpush1.msra.mxu0 0.0
    %1234 = vmatprep.subr.mxu0 0.0
    %1235 = vmatpush1.msra.mxu0 0.0
    %1236 = vmatprep.subr.mxu0 0.0
    %1237 = vmatpush1.msra.mxu0 0.0
    %1238 = vmatprep.subr.mxu0 0.0
    %1239 = vmatpush1.msra.mxu0 0.0
    %1240 = vmatprep.subr.mxu0 0.0
    %1241 = vmatpush1.msra.mxu0 0.0
    %1242 = vmatprep.subr.mxu0 0.0
    %1243 = vmatpush1.msra.mxu0 0.0
    %1244 = vmatprep.subr.mxu0 0.0
    %1245 = vmatpush1.msra.mxu0 0.0
    %1246 = vmatprep.subr.mxu0 0.0
    %1247 = vmatpush1.msra.mxu0 0.0
    %1248 = vmatprep.subr.mxu0 0.0
    %1249 = vmatpush1.msra.mxu0 0.0
    %1250 = vmatprep.subr.mxu0 0.0
    %1251 = vmatpush1.msra.mxu0 0.0
    %1252 = vmatprep.subr.mxu0 0.0
    %1253 = vmatpush1.msra.mxu0 0.0
    %1254 = vmatprep.subr.mxu0 0.0
    %1255 = vmatpush1.msra.mxu0 0.0
    %1256 = vmatprep.subr.mxu0 0.0
    %1257 = vmatpush1.msra.mxu0 0.0
    %1258 = vmatprep.subr.mxu0 0.0
    %1259 = vmatpush1.msra.mxu0 0.0
    %1260 = vmatprep.subr.mxu0 0.0
    %1261 = vmatpush1.msra.mxu0 0.0
    %1262 = vmatprep.subr.mxu0 0.0
    %1263 = vmatpush1.msra.mxu0 0.0
    %1264 = vmatprep.subr.mxu0 0.0
    %1265 = vmatpush1.msra.mxu0 0.0
    %1266 = vmatprep.subr.mxu0 0.0
    %1267 = vmatpush1.msra.mxu0 0.0
    %1268 = vmatprep.subr.mxu0 0.0
    %1269 = vmatpush1.msra.mxu0 0.0
    %1270 = vmatprep.mubr.f32.mxu0 0.0
    %1271 = vmatmul.mubr.f32.gmra.mrb[0].mxu0 %v962
    %v1272 = vpop.f32.mrb[0].mxu0
    %v1273 = vadd.f32 0.0, %v1272
    %v1274 = vpop.f32.mrb[0].mxu0
    %1275 = vmatprep.mubr.f32.mxu0 0.0
    %1276 = vmatmul.mubr.f32.gmra.mrb[0].mxu0 %v965
    %v1277 = vpop.f32.mrb[0].mxu0
    %v1278 = vadd.f32 0.0, %v1277
    %v1279 = vpop.f32.mrb[0].mxu0
    %1280 = vmatprep.mubr.f32.mxu0 0.0
    %1281 = vmatmul.mubr.f32.gmra.mrb[0].mxu0 %v1201
    %v1282 = vpop.f32.mrb[0].mxu0
    %v1283 = vadd.f32 0.0, %v1282
    %v1284 = vpop.f32.mrb[0].mxu0
    %1285 = vmatprep.mubr.f32.mxu0 0.0
    %1286 = vmatmul.mubr.f32.gmra.mrb[0].mxu0 %v1204
    %v1287 = vpop.f32.mrb[0].mxu0
    %v1288 = vadd.f32 0.0, %v1287
    %v1289 = vpop.f32.mrb[0].mxu0
    %1290 = vdwg.mxu0
    %v1291 = vadd.f32 %v1175, %v1273
    %v1292 = vadd.f32 %v1176, %v1278
    %v1293 = vadd.f32 %v1177, %v1283
    %v1294 = vadd.f32 %v1178, %v1288
    %v1295 = vrot.slane %v780, 7
    %v1296 = vsel %vm239, %v808, %v1295
    %v1299 = vrot.slane %v782, 1
    %v1300 = vsel %vm812, %v814, %v1299
    %v1302 = vrot.slane %v788, 2
    %v1303 = vsel %vm740, %v819, %v1302
    %v1305 = vsel %vm627, %v1296, %v1300
    %v1306 = vsel %vm627, %v786, %v1303
    %s1307 = scalar_lea.vmem %s3, 128
    %v1308 = vld [vmem:[%s1307] sm:$0xff]
    %v1309 = vld [vmem:[%s1307 + $0x8] sm:$0xff]
    %v1310 = vld [vmem:[%s1307 + $0x10] sm:$0xff]
    %v1311 = vld [vmem:[%s1307 + $0x18] sm:$0xff]
    %v1313 = vsel %vm857, %v1305, 0
    %v1316 = vsel %vm857, %v1306, 0
    %1318 = vmatprep.subr.mxu0 0.0
    %1319 = vmatpush1.msra.mxu0 %v1308
    %1320 = vmatprep.subr.mxu0 0.0
    %1321 = vmatpush1.msra.mxu0 %v1309
    %1322 = vmatprep.subr.mxu0 0.0
    %1323 = vmatpush1.msra.mxu0 %v1310
    %1324 = vmatprep.subr.mxu0 0.0
    %1325 = vmatpush1.msra.mxu0 %v1311
    %1326 = vmatprep.subr.mxu0 0.0
    %1327 = vmatpush1.msra.mxu0 0.0
    %1328 = vmatprep.subr.mxu0 0.0
    %1329 = vmatpush1.msra.mxu0 0.0
    %1330 = vmatprep.subr.mxu0 0.0
    %1331 = vmatpush1.msra.mxu0 0.0
    %1332 = vmatprep.subr.mxu0 0.0
    %1333 = vmatpush1.msra.mxu0 0.0
    %1334 = vmatprep.subr.mxu0 0.0
    %1335 = vmatpush1.msra.mxu0 0.0
    %1336 = vmatprep.subr.mxu0 0.0
    %1337 = vmatpush1.msra.mxu0 0.0
    %1338 = vmatprep.subr.mxu0 0.0
    %1339 = vmatpush1.msra.mxu0 0.0
    %1340 = vmatprep.subr.mxu0 0.0
    %1341 = vmatpush1.msra.mxu0 0.0
    %1342 = vmatprep.subr.mxu0 0.0
    %1343 = vmatpush1.msra.mxu0 0.0
    %1344 = vmatprep.subr.mxu0 0.0
    %1345 = vmatpush1.msra.mxu0 0.0
    %1346 = vmatprep.subr.mxu0 0.0
    %1347 = vmatpush1.msra.mxu0 0.0
    %1348 = vmatprep.subr.mxu0 0.0
    %1349 = vmatpush1.msra.mxu0 0.0
    %1350 = vmatprep.subr.mxu0 0.0
    %1351 = vmatpush1.msra.mxu0 0.0
    %1352 = vmatprep.subr.mxu0 0.0
    %1353 = vmatpush1.msra.mxu0 0.0
    %1354 = vmatprep.subr.mxu0 0.0
    %1355 = vmatpush1.msra.mxu0 0.0
    %1356 = vmatprep.subr.mxu0 0.0
    %1357 = vmatpush1.msra.mxu0 0.0
    %1358 = vmatprep.subr.mxu0 0.0
    %1359 = vmatpush1.msra.mxu0 0.0
    %1360 = vmatprep.subr.mxu0 0.0
    %1361 = vmatpush1.msra.mxu0 0.0
    %1362 = vmatprep.subr.mxu0 0.0
    %1363 = vmatpush1.msra.mxu0 0.0
    %1364 = vmatprep.subr.mxu0 0.0
    %1365 = vmatpush1.msra.mxu0 0.0
    %1366 = vmatprep.subr.mxu0 0.0
    %1367 = vmatpush1.msra.mxu0 0.0
    %1368 = vmatprep.subr.mxu0 0.0
    %1369 = vmatpush1.msra.mxu0 0.0
    %1370 = vmatprep.subr.mxu0 0.0
    %1371 = vmatpush1.msra.mxu0 0.0
    %1372 = vmatprep.subr.mxu0 0.0
    %1373 = vmatpush1.msra.mxu0 0.0
    %1374 = vmatprep.subr.mxu0 0.0
    %1375 = vmatpush1.msra.mxu0 0.0
    %1376 = vmatprep.subr.mxu0 0.0
    %1377 = vmatpush1.msra.mxu0 0.0
    %1378 = vmatprep.subr.mxu0 0.0
    %1379 = vmatpush1.msra.mxu0 0.0
    %1380 = vmatprep.subr.mxu0 0.0
    %1381 = vmatpush1.msra.mxu0 0.0
    %1382 = vmatprep.mubr.f32.mxu0 0.0
    %1383 = vmatmul.mubr.f32.gmra.mrb[0].mxu0 %v865
    %v1384 = vpop.f32.mrb[0].mxu0
    %v1385 = vadd.f32 0.0, %v1384
    %v1386 = vpop.f32.mrb[0].mxu0
    %1387 = vmatprep.mubr.f32.mxu0 0.0
    %1388 = vmatmul.mubr.f32.gmra.mrb[0].mxu0 %v868
    %v1389 = vpop.f32.mrb[0].mxu0
    %v1390 = vadd.f32 0.0, %v1389
    %v1391 = vpop.f32.mrb[0].mxu0
    %1392 = vmatprep.mubr.f32.mxu0 0.0
    %1393 = vmatmul.mubr.f32.gmra.mrb[0].mxu0 %v1313
    %v1394 = vpop.f32.mrb[0].mxu0
    %v1395 = vadd.f32 0.0, %v1394
    %v1396 = vpop.f32.mrb[0].mxu0
    %1397 = vmatprep.mubr.f32.mxu0 0.0
    %1398 = vmatmul.mubr.f32.gmra.mrb[0].mxu0 %v1316
    %v1399 = vpop.f32.mrb[0].mxu0
    %v1400 = vadd.f32 0.0, %v1399
    %v1401 = vpop.f32.mrb[0].mxu0
    %1402 = vdwg.mxu0
    %v1403 = vadd.f32 %v1291, %v1385
    %v1404 = vadd.f32 %v1292, %v1390
    %v1405 = vadd.f32 %v1293, %v1395
    %v1406 = vadd.f32 %v1294, %v1400
    %v1407 = vrot.slane %v782, 2
    %v1408 = vsel %vm740, %v840, %v1407
    %v1410 = vrot.slane %v786, 1
    %v1412 = vrot.slane %v788, 3
    %v1413 = vsel %vm801, %v845, %v1412
    %v1415 = vsel %vm627, %v780, %v1408
    %v1416 = vsel %vm627, %v1410, %v1413
    %s1417 = scalar_lea.vmem %s3, 160
    %v1418 = vld [vmem:[%s1417] sm:$0xff]
    %v1419 = vld [vmem:[%s1417 + $0x8] sm:$0xff]
    %v1420 = vld [vmem:[%s1417 + $0x10] sm:$0xff]
    %v1421 = vld [vmem:[%s1417 + $0x18] sm:$0xff]
    %v1423 = vsel %vm857, %v1415, 0
    %v1426 = vsel %vm857, %v1416, 0
    %1428 = vmatprep.subr.mxu0 0.0
    %1429 = vmatpush1.msra.mxu0 %v1418
    %1430 = vmatprep.subr.mxu0 0.0
    %1431 = vmatpush1.msra.mxu0 %v1419
    %1432 = vmatprep.subr.mxu0 0.0
    %1433 = vmatpush1.msra.mxu0 %v1420
    %1434 = vmatprep.subr.mxu0 0.0
    %1435 = vmatpush1.msra.mxu0 %v1421
    %1436 = vmatprep.subr.mxu0 0.0
    %1437 = vmatpush1.msra.mxu0 0.0
    %1438 = vmatprep.subr.mxu0 0.0
    %1439 = vmatpush1.msra.mxu0 0.0
    %1440 = vmatprep.subr.mxu0 0.0
    %1441 = vmatpush1.msra.mxu0 0.0
    %1442 = vmatprep.subr.mxu0 0.0
    %1443 = vmatpush1.msra.mxu0 0.0
    %1444 = vmatprep.subr.mxu0 0.0
    %1445 = vmatpush1.msra.mxu0 0.0
    %1446 = vmatprep.subr.mxu0 0.0
    %1447 = vmatpush1.msra.mxu0 0.0
    %1448 = vmatprep.subr.mxu0 0.0
    %1449 = vmatpush1.msra.mxu0 0.0
    %1450 = vmatprep.subr.mxu0 0.0
    %1451 = vmatpush1.msra.mxu0 0.0
    %1452 = vmatprep.subr.mxu0 0.0
    %1453 = vmatpush1.msra.mxu0 0.0
    %1454 = vmatprep.subr.mxu0 0.0
    %1455 = vmatpush1.msra.mxu0 0.0
    %1456 = vmatprep.subr.mxu0 0.0
    %1457 = vmatpush1.msra.mxu0 0.0
    %1458 = vmatprep.subr.mxu0 0.0
    %1459 = vmatpush1.msra.mxu0 0.0
    %1460 = vmatprep.subr.mxu0 0.0
    %1461 = vmatpush1.msra.mxu0 0.0
    %1462 = vmatprep.subr.mxu0 0.0
    %1463 = vmatpush1.msra.mxu0 0.0
    %1464 = vmatprep.subr.mxu0 0.0
    %1465 = vmatpush1.msra.mxu0 0.0
    %1466 = vmatprep.subr.mxu0 0.0
    %1467 = vmatpush1.msra.mxu0 0.0
    %1468 = vmatprep.subr.mxu0 0.0
    %1469 = vmatpush1.msra.mxu0 0.0
    %1470 = vmatprep.subr.mxu0 0.0
    %1471 = vmatpush1.msra.mxu0 0.0
    %1472 = vmatprep.subr.mxu0 0.0
    %1473 = vmatpush1.msra.mxu0 0.0
    %1474 = vmatprep.subr.mxu0 0.0
    %1475 = vmatpush1.msra.mxu0 0.0
    %1476 = vmatprep.subr.mxu0 0.0
    %1477 = vmatpush1.msra.mxu0 0.0
    %1478 = vmatprep.subr.mxu0 0.0
    %1479 = vmatpush1.msra.mxu0 0.0
    %1480 = vmatprep.subr.mxu0 0.0
    %1481 = vmatpush1.msra.mxu0 0.0
    %1482 = vmatprep.subr.mxu0 0.0
    %1483 = vmatpush1.msra.mxu0 0.0
    %1484 = vmatprep.subr.mxu0 0.0
    %1485 = vmatpush1.msra.mxu0 0.0
    %1486 = vmatprep.subr.mxu0 0.0
    %1487 = vmatpush1.msra.mxu0 0.0
    %1488 = vmatprep.subr.mxu0 0.0
    %1489 = vmatpush1.msra.mxu0 0.0
    %1490 = vmatprep.subr.mxu0 0.0
    %1491 = vmatpush1.msra.mxu0 0.0
    %1492 = vmatprep.mubr.f32.mxu0 0.0
    %1493 = vmatmul.mubr.f32.gmra.mrb[0].mxu0 %v1085
    %v1494 = vpop.f32.mrb[0].mxu0
    %v1495 = vadd.f32 0.0, %v1494
    %v1496 = vpop.f32.mrb[0].mxu0
    %1497 = vmatprep.mubr.f32.mxu0 0.0
    %1498 = vmatmul.mubr.f32.gmra.mrb[0].mxu0 %v1088
    %v1499 = vpop.f32.mrb[0].mxu0
    %v1500 = vadd.f32 0.0, %v1499
    %v1501 = vpop.f32.mrb[0].mxu0
    %1502 = vmatprep.mubr.f32.mxu0 0.0
    %1503 = vmatmul.mubr.f32.gmra.mrb[0].mxu0 %v1423
    %v1504 = vpop.f32.mrb[0].mxu0
    %v1505 = vadd.f32 0.0, %v1504
    %v1506 = vpop.f32.mrb[0].mxu0
    %1507 = vmatprep.mubr.f32.mxu0 0.0
    %1508 = vmatmul.mubr.f32.gmra.mrb[0].mxu0 %v1426
    %v1509 = vpop.f32.mrb[0].mxu0
    %v1510 = vadd.f32 0.0, %v1509
    %v1511 = vpop.f32.mrb[0].mxu0
    %1512 = vdwg.mxu0
    %v1513 = vadd.f32 %v1403, %v1495
    %v1514 = vadd.f32 %v1404, %v1500
    %v1515 = vadd.f32 %v1405, %v1505
    %v1516 = vadd.f32 %v1406, %v1510
    %vm1517 = vcmask 1042432
    %v1518 = vrot.slane %v780, 5
    %v1519 = vrot.slane %v781, 5
    %v1520 = vsel %vm1517, %v1518, %v1519
    %v1522 = vrot.slane %v782, 7
    %v1524 = vrot.slane %v786, 6
    %v1525 = vrot.slane %v787, 6
    %v1526 = vsel %vm1179, %v1524, %v1525
    %v1528 = vsel %vm627, %v1520, %v1522
    %v1529 = vsel %vm627, %v1526, %v788
    %s1530 = scalar_lea.vmem %s3, 192
    %v1531 = vld [vmem:[%s1530] sm:$0xff]
    %v1532 = vld [vmem:[%s1530 + $0x8] sm:$0xff]
    %v1533 = vld [vmem:[%s1530 + $0x10] sm:$0xff]
    %v1534 = vld [vmem:[%s1530 + $0x18] sm:$0xff]
    %v1536 = vsel %vm857, %v1528, 0
    %v1539 = vsel %vm857, %v1529, 0
    %1541 = vmatprep.subr.mxu0 0.0
    %1542 = vmatpush1.msra.mxu0 %v1531
    %1543 = vmatprep.subr.mxu0 0.0
    %1544 = vmatpush1.msra.mxu0 %v1532
    %1545 = vmatprep.subr.mxu0 0.0
    %1546 = vmatpush1.msra.mxu0 %v1533
    %1547 = vmatprep.subr.mxu0 0.0
    %1548 = vmatpush1.msra.mxu0 %v1534
    %1549 = vmatprep.subr.mxu0 0.0
    %1550 = vmatpush1.msra.mxu0 0.0
    %1551 = vmatprep.subr.mxu0 0.0
    %1552 = vmatpush1.msra.mxu0 0.0
    %1553 = vmatprep.subr.mxu0 0.0
    %1554 = vmatpush1.msra.mxu0 0.0
    %1555 = vmatprep.subr.mxu0 0.0
    %1556 = vmatpush1.msra.mxu0 0.0
    %1557 = vmatprep.subr.mxu0 0.0
    %1558 = vmatpush1.msra.mxu0 0.0
    %1559 = vmatprep.subr.mxu0 0.0
    %1560 = vmatpush1.msra.mxu0 0.0
    %1561 = vmatprep.subr.mxu0 0.0
    %1562 = vmatpush1.msra.mxu0 0.0
    %1563 = vmatprep.subr.mxu0 0.0
    %1564 = vmatpush1.msra.mxu0 0.0
    %1565 = vmatprep.subr.mxu0 0.0
    %1566 = vmatpush1.msra.mxu0 0.0
    %1567 = vmatprep.subr.mxu0 0.0
    %1568 = vmatpush1.msra.mxu0 0.0
    %1569 = vmatprep.subr.mxu0 0.0
    %1570 = vmatpush1.msra.mxu0 0.0
    %1571 = vmatprep.subr.mxu0 0.0
    %1572 = vmatpush1.msra.mxu0 0.0
    %1573 = vmatprep.subr.mxu0 0.0
    %1574 = vmatpush1.msra.mxu0 0.0
    %1575 = vmatprep.subr.mxu0 0.0
    %1576 = vmatpush1.msra.mxu0 0.0
    %1577 = vmatprep.subr.mxu0 0.0
    %1578 = vmatpush1.msra.mxu0 0.0
    %1579 = vmatprep.subr.mxu0 0.0
    %1580 = vmatpush1.msra.mxu0 0.0
    %1581 = vmatprep.subr.mxu0 0.0
    %1582 = vmatpush1.msra.mxu0 0.0
    %1583 = vmatprep.subr.mxu0 0.0
    %1584 = vmatpush1.msra.mxu0 0.0
    %1585 = vmatprep.subr.mxu0 0.0
    %1586 = vmatpush1.msra.mxu0 0.0
    %1587 = vmatprep.subr.mxu0 0.0
    %1588 = vmatpush1.msra.mxu0 0.0
    %1589 = vmatprep.subr.mxu0 0.0
    %1590 = vmatpush1.msra.mxu0 0.0
    %1591 = vmatprep.subr.mxu0 0.0
    %1592 = vmatpush1.msra.mxu0 0.0
    %1593 = vmatprep.subr.mxu0 0.0
    %1594 = vmatpush1.msra.mxu0 0.0
    %1595 = vmatprep.subr.mxu0 0.0
    %1596 = vmatpush1.msra.mxu0 0.0
    %1597 = vmatprep.subr.mxu0 0.0
    %1598 = vmatpush1.msra.mxu0 0.0
    %1599 = vmatprep.subr.mxu0 0.0
    %1600 = vmatpush1.msra.mxu0 0.0
    %1601 = vmatprep.subr.mxu0 0.0
    %1602 = vmatpush1.msra.mxu0 0.0
    %1603 = vmatprep.subr.mxu0 0.0
    %1604 = vmatpush1.msra.mxu0 0.0
    %1605 = vmatprep.mubr.f32.mxu0 0.0
    %1606 = vmatmul.mubr.f32.gmra.mrb[0].mxu0 %v1201
    %v1607 = vpop.f32.mrb[0].mxu0
    %v1608 = vadd.f32 0.0, %v1607
    %v1609 = vpop.f32.mrb[0].mxu0
    %1610 = vmatprep.mubr.f32.mxu0 0.0
    %1611 = vmatmul.mubr.f32.gmra.mrb[0].mxu0 %v1204
    %v1612 = vpop.f32.mrb[0].mxu0
    %v1613 = vadd.f32 0.0, %v1612
    %v1614 = vpop.f32.mrb[0].mxu0
    %1615 = vmatprep.mubr.f32.mxu0 0.0
    %1616 = vmatmul.mubr.f32.gmra.mrb[0].mxu0 %v1536
    %v1617 = vpop.f32.mrb[0].mxu0
    %v1618 = vadd.f32 0.0, %v1617
    %v1619 = vpop.f32.mrb[0].mxu0
    %1620 = vmatprep.mubr.f32.mxu0 0.0
    %1621 = vmatmul.mubr.f32.gmra.mrb[0].mxu0 %v1539
    %v1622 = vpop.f32.mrb[0].mxu0
    %v1623 = vadd.f32 0.0, %v1622
    %v1624 = vpop.f32.mrb[0].mxu0
    %1625 = vdwg.mxu0
    %v1626 = vadd.f32 %v1513, %v1608
    %v1627 = vadd.f32 %v1514, %v1613
    %v1628 = vadd.f32 %v1515, %v1618
    %v1629 = vadd.f32 %v1516, %v1623
    %v1630 = vrot.slane %v781, 6
    %v1631 = vsel %vm1179, %v1181, %v1630
    %v1633 = vrot.slane %v787, 7
    %v1634 = vsel %vm239, %v1185, %v1633
    %v1637 = vrot.slane %v789, 1
    %v1638 = vsel %vm812, %v1190, %v1637
    %v1640 = vsel %vm627, %v1631, %v782
    %v1641 = vsel %vm627, %v1634, %v1638
    %s1642 = scalar_lea.vmem %s3, 224
    %v1643 = vld [vmem:[%s1642] sm:$0xff]
    %v1644 = vld [vmem:[%s1642 + $0x8] sm:$0xff]
    %v1645 = vld [vmem:[%s1642 + $0x10] sm:$0xff]
    %v1646 = vld [vmem:[%s1642 + $0x18] sm:$0xff]
    %v1648 = vsel %vm857, %v1640, 0
    %v1651 = vsel %vm857, %v1641, 0
    %1653 = vmatprep.subr.mxu0 0.0
    %1654 = vmatpush1.msra.mxu0 %v1643
    %1655 = vmatprep.subr.mxu0 0.0
    %1656 = vmatpush1.msra.mxu0 %v1644
    %1657 = vmatprep.subr.mxu0 0.0
    %1658 = vmatpush1.msra.mxu0 %v1645
    %1659 = vmatprep.subr.mxu0 0.0
    %1660 = vmatpush1.msra.mxu0 %v1646
    %1661 = vmatprep.subr.mxu0 0.0
    %1662 = vmatpush1.msra.mxu0 0.0
    %1663 = vmatprep.subr.mxu0 0.0
    %1664 = vmatpush1.msra.mxu0 0.0
    %1665 = vmatprep.subr.mxu0 0.0
    %1666 = vmatpush1.msra.mxu0 0.0
    %1667 = vmatprep.subr.mxu0 0.0
    %1668 = vmatpush1.msra.mxu0 0.0
    %1669 = vmatprep.subr.mxu0 0.0
    %1670 = vmatpush1.msra.mxu0 0.0
    %1671 = vmatprep.subr.mxu0 0.0
    %1672 = vmatpush1.msra.mxu0 0.0
    %1673 = vmatprep.subr.mxu0 0.0
    %1674 = vmatpush1.msra.mxu0 0.0
    %1675 = vmatprep.subr.mxu0 0.0
    %1676 = vmatpush1.msra.mxu0 0.0
    %1677 = vmatprep.subr.mxu0 0.0
    %1678 = vmatpush1.msra.mxu0 0.0
    %1679 = vmatprep.subr.mxu0 0.0
    %1680 = vmatpush1.msra.mxu0 0.0
    %1681 = vmatprep.subr.mxu0 0.0
    %1682 = vmatpush1.msra.mxu0 0.0
    %1683 = vmatprep.subr.mxu0 0.0
    %1684 = vmatpush1.msra.mxu0 0.0
    %1685 = vmatprep.subr.mxu0 0.0
    %1686 = vmatpush1.msra.mxu0 0.0
    %1687 = vmatprep.subr.mxu0 0.0
    %1688 = vmatpush1.msra.mxu0 0.0
    %1689 = vmatprep.subr.mxu0 0.0
    %1690 = vmatpush1.msra.mxu0 0.0
    %1691 = vmatprep.subr.mxu0 0.0
    %1692 = vmatpush1.msra.mxu0 0.0
    %1693 = vmatprep.subr.mxu0 0.0
    %1694 = vmatpush1.msra.mxu0 0.0
    %1695 = vmatprep.subr.mxu0 0.0
    %1696 = vmatpush1.msra.mxu0 0.0
    %1697 = vmatprep.subr.mxu0 0.0
    %1698 = vmatpush1.msra.mxu0 0.0
    %1699 = vmatprep.subr.mxu0 0.0
    %1700 = vmatpush1.msra.mxu0 0.0
    %1701 = vmatprep.subr.mxu0 0.0
    %1702 = vmatpush1.msra.mxu0 0.0
    %1703 = vmatprep.subr.mxu0 0.0
    %1704 = vmatpush1.msra.mxu0 0.0
    %1705 = vmatprep.subr.mxu0 0.0
    %1706 = vmatpush1.msra.mxu0 0.0
    %1707 = vmatprep.subr.mxu0 0.0
    %1708 = vmatpush1.msra.mxu0 0.0
    %1709 = vmatprep.subr.mxu0 0.0
    %1710 = vmatpush1.msra.mxu0 0.0
    %1711 = vmatprep.subr.mxu0 0.0
    %1712 = vmatpush1.msra.mxu0 0.0
    %1713 = vmatprep.subr.mxu0 0.0
    %1714 = vmatpush1.msra.mxu0 0.0
    %1715 = vmatprep.subr.mxu0 0.0
    %1716 = vmatpush1.msra.mxu0 0.0
    %1717 = vmatprep.mubr.f32.mxu0 0.0
    %1718 = vmatmul.mubr.f32.gmra.mrb[0].mxu0 %v1313
    %v1719 = vpop.f32.mrb[0].mxu0
    %v1720 = vadd.f32 0.0, %v1719
    %v1721 = vpop.f32.mrb[0].mxu0
    %1722 = vmatprep.mubr.f32.mxu0 0.0
    %1723 = vmatmul.mubr.f32.gmra.mrb[0].mxu0 %v1316
    %v1724 = vpop.f32.mrb[0].mxu0
    %v1725 = vadd.f32 0.0, %v1724
    %v1726 = vpop.f32.mrb[0].mxu0
    %1727 = vmatprep.mubr.f32.mxu0 0.0
    %1728 = vmatmul.mubr.f32.gmra.mrb[0].mxu0 %v1648
    %v1729 = vpop.f32.mrb[0].mxu0
    %v1730 = vadd.f32 0.0, %v1729
    %v1731 = vpop.f32.mrb[0].mxu0
    %1732 = vmatprep.mubr.f32.mxu0 0.0
    %1733 = vmatmul.mubr.f32.gmra.mrb[0].mxu0 %v1651
    %v1734 = vpop.f32.mrb[0].mxu0
    %v1735 = vadd.f32 0.0, %v1734
    %v1736 = vpop.f32.mrb[0].mxu0
    %1737 = vdwg.mxu0
    %v1738 = vadd.f32 %v1626, %v1720
    %v1739 = vadd.f32 %v1627, %v1725
    %v1740 = vadd.f32 %v1628, %v1730
    %v1741 = vadd.f32 %v1629, %v1735
    %v1742 = vrot.slane %v781, 7
    %v1743 = vsel %vm239, %v1295, %v1742
    %v1746 = vrot.slane %v783, 1
    %v1747 = vsel %vm812, %v1299, %v1746
    %v1749 = vrot.slane %v789, 2
    %v1750 = vsel %vm740, %v1302, %v1749
    %v1752 = vsel %vm627, %v1743, %v1747
    %v1753 = vsel %vm627, %v787, %v1750
    %s1754 = scalar_lea.vmem %s3, 256
    %v1755 = vld [vmem:[%s1754] sm:$0xff]
    %v1756 = vld [vmem:[%s1754 + $0x8] sm:$0xff]
    %v1757 = vld [vmem:[%s1754 + $0x10] sm:$0xff]
    %v1758 = vld [vmem:[%s1754 + $0x18] sm:$0xff]
    %v1760 = vsel %vm857, %v1752, 0
    %v1763 = vsel %vm857, %v1753, 0
    %1765 = vmatprep.subr.mxu0 0.0
    %1766 = vmatpush1.msra.mxu0 %v1755
    %1767 = vmatprep.subr.mxu0 0.0
    %1768 = vmatpush1.msra.mxu0 %v1756
    %1769 = vmatprep.subr.mxu0 0.0
    %1770 = vmatpush1.msra.mxu0 %v1757
    %1771 = vmatprep.subr.mxu0 0.0
    %1772 = vmatpush1.msra.mxu0 %v1758
    %1773 = vmatprep.subr.mxu0 0.0
    %1774 = vmatpush1.msra.mxu0 0.0
    %1775 = vmatprep.subr.mxu0 0.0
    %1776 = vmatpush1.msra.mxu0 0.0
    %1777 = vmatprep.subr.mxu0 0.0
    %1778 = vmatpush1.msra.mxu0 0.0
    %1779 = vmatprep.subr.mxu0 0.0
    %1780 = vmatpush1.msra.mxu0 0.0
    %1781 = vmatprep.subr.mxu0 0.0
    %1782 = vmatpush1.msra.mxu0 0.0
    %1783 = vmatprep.subr.mxu0 0.0
    %1784 = vmatpush1.msra.mxu0 0.0
    %1785 = vmatprep.subr.mxu0 0.0
    %1786 = vmatpush1.msra.mxu0 0.0
    %1787 = vmatprep.subr.mxu0 0.0
    %1788 = vmatpush1.msra.mxu0 0.0
    %1789 = vmatprep.subr.mxu0 0.0
    %1790 = vmatpush1.msra.mxu0 0.0
    %1791 = vmatprep.subr.mxu0 0.0
    %1792 = vmatpush1.msra.mxu0 0.0
    %1793 = vmatprep.subr.mxu0 0.0
    %1794 = vmatpush1.msra.mxu0 0.0
    %1795 = vmatprep.subr.mxu0 0.0
    %1796 = vmatpush1.msra.mxu0 0.0
    %1797 = vmatprep.subr.mxu0 0.0
    %1798 = vmatpush1.msra.mxu0 0.0
    %1799 = vmatprep.subr.mxu0 0.0
    %1800 = vmatpush1.msra.mxu0 0.0
    %1801 = vmatprep.subr.mxu0 0.0
    %1802 = vmatpush1.msra.mxu0 0.0
    %1803 = vmatprep.subr.mxu0 0.0
    %1804 = vmatpush1.msra.mxu0 0.0
    %1805 = vmatprep.subr.mxu0 0.0
    %1806 = vmatpush1.msra.mxu0 0.0
    %1807 = vmatprep.subr.mxu0 0.0
    %1808 = vmatpush1.msra.mxu0 0.0
    %1809 = vmatprep.subr.mxu0 0.0
    %1810 = vmatpush1.msra.mxu0 0.0
    %1811 = vmatprep.subr.mxu0 0.0
    %1812 = vmatpush1.msra.mxu0 0.0
    %1813 = vmatprep.subr.mxu0 0.0
    %1814 = vmatpush1.msra.mxu0 0.0
    %1815 = vmatprep.subr.mxu0 0.0
    %1816 = vmatpush1.msra.mxu0 0.0
    %1817 = vmatprep.subr.mxu0 0.0
    %1818 = vmatpush1.msra.mxu0 0.0
    %1819 = vmatprep.subr.mxu0 0.0
    %1820 = vmatpush1.msra.mxu0 0.0
    %1821 = vmatprep.subr.mxu0 0.0
    %1822 = vmatpush1.msra.mxu0 0.0
    %1823 = vmatprep.subr.mxu0 0.0
    %1824 = vmatpush1.msra.mxu0 0.0
    %1825 = vmatprep.subr.mxu0 0.0
    %1826 = vmatpush1.msra.mxu0 0.0
    %1827 = vmatprep.subr.mxu0 0.0
    %1828 = vmatpush1.msra.mxu0 0.0
    %1829 = vmatprep.mubr.f32.mxu0 0.0
    %1830 = vmatmul.mubr.f32.gmra.mrb[0].mxu0 %v1423
    %v1831 = vpop.f32.mrb[0].mxu0
    %v1832 = vadd.f32 0.0, %v1831
    %v1833 = vpop.f32.mrb[0].mxu0
    %1834 = vmatprep.mubr.f32.mxu0 0.0
    %1835 = vmatmul.mubr.f32.gmra.mrb[0].mxu0 %v1426
    %v1836 = vpop.f32.mrb[0].mxu0
    %v1837 = vadd.f32 0.0, %v1836
    %v1838 = vpop.f32.mrb[0].mxu0
    %1839 = vmatprep.mubr.f32.mxu0 0.0
    %1840 = vmatmul.mubr.f32.gmra.mrb[0].mxu0 %v1760
    %v1841 = vpop.f32.mrb[0].mxu0
    %v1842 = vadd.f32 0.0, %v1841
    %v1843 = vpop.f32.mrb[0].mxu0
    %1844 = vmatprep.mubr.f32.mxu0 0.0
    %1845 = vmatmul.mubr.f32.gmra.mrb[0].mxu0 %v1763
    %v1846 = vpop.f32.mrb[0].mxu0
    %v1847 = vadd.f32 0.0, %v1846
    %v1848 = vpop.f32.mrb[0].mxu0
    %1849 = vdwg.mxu0
    %v1850 = vadd.f32 %v1738, %v1832
    %v1851 = vadd.f32 %v1739, %v1837
    %v1852 = vadd.f32 %v1740, %v1842
    %v1853 = vadd.f32 %v1741, %v1847
    %v1854 = vld [vmem:[%s4] sm:$0x1]
    %v1856 = vlaneseq
    %v1857 = vshrl.u32 %v1856, 7
    %v1858 = vsub.s32 0, %v1857
    %v1859 = vrot.slane %v1854, %v1858
    %v1861 = vadd.f32 %v1850, %v1859
    %v1862 = vadd.f32 %v1851, %v1859
    %v1863 = vadd.f32 %v1852, %v1859
    %v1864 = vadd.f32 %v1853, %v1859
    %v1865 = vmax.f32 %v1861, 0.0
    %v1866 = vmax.f32 %v1862, 0.0
    %v1867 = vmax.f32 %v1863, 0.0
    %v1868 = vmax.f32 %v1864, 0.0
    %v1869 = vmax.f32 %v1865, %v1867
    %v1870 = vmax.f32 %v1866, %v1868
    %v1872 = vrot.slane %v1869, 1
    %v1874 = vmax.f32 %v1869, %v1872
    %v1876 = vrot.slane %v1870, 1
    %v1878 = vmax.f32 %v1870, %v1876
    %v1880 = vrot.slane %v1878, 7
    %v1882 = vsel %vm239, %v1874, %v1880
    %v1883 = vld [vmem:[%s5] sm:$0xff]
    %v1884 = vld [vmem:[%s5 + $0x8] sm:$0xff]
    %v1885 = vld [vmem:[%s5 + $0x10] sm:$0xff]
    %v1886 = vld [vmem:[%s5 + $0x18] sm:$0xff]
    %v1887 = vld [vmem:[%s5 + $0x20] sm:$0xff]
    %v1888 = vld [vmem:[%s5 + $0x28] sm:$0xff]
    %v1889 = vld [vmem:[%s5 + $0x30] sm:$0xff]
    %v1890 = vld [vmem:[%s5 + $0x38] sm:$0xff]
    %v1892 = vrot.slane %v1874, 2
    %v1894 = vrot.slane %v1878, 1
    %v1896 = vsel %vm239, %v1892, %v1894
    %v1897 = vld [vmem:[%s5 + $0x40] sm:$0xff]
    %v1898 = vld [vmem:[%s5 + $0x48] sm:$0xff]
    %v1899 = vld [vmem:[%s5 + $0x50] sm:$0xff]
    %v1900 = vld [vmem:[%s5 + $0x58] sm:$0xff]
    %v1901 = vld [vmem:[%s5 + $0x60] sm:$0xff]
    %v1902 = vld [vmem:[%s5 + $0x68] sm:$0xff]
    %v1903 = vld [vmem:[%s5 + $0x70] sm:$0xff]
    %v1904 = vld [vmem:[%s5 + $0x78] sm:$0xff]
    %vm1905 = vcmask 523264
    %v1907 = vsel %vm1905, %v1896, 0
    %1909 = vmatprep.subr.mxu0 0.0
    %1910 = vmatpush1.msra.mxu0 %v1897
    %1911 = vmatprep.subr.mxu0 0.0
    %1912 = vmatpush1.msra.mxu0 %v1898
    %1913 = vmatprep.subr.mxu0 0.0
    %1914 = vmatpush1.msra.mxu0 %v1899
    %1915 = vmatprep.subr.mxu0 0.0
    %1916 = vmatpush1.msra.mxu0 %v1900
    %1917 = vmatprep.subr.mxu0 0.0
    %1918 = vmatpush1.msra.mxu0 %v1901
    %1919 = vmatprep.subr.mxu0 0.0
    %1920 = vmatpush1.msra.mxu0 %v1902
    %1921 = vmatprep.subr.mxu0 0.0
    %1922 = vmatpush1.msra.mxu0 %v1903
    %1923 = vmatprep.subr.mxu0 0.0
    %1924 = vmatpush1.msra.mxu0 %v1904
    %1925 = vmatprep.subr.mxu0 0.0
    %1926 = vmatpush1.msra.mxu0 0.0
    %1927 = vmatprep.subr.mxu0 0.0
    %1928 = vmatpush1.msra.mxu0 0.0
    %1929 = vmatprep.subr.mxu0 0.0
    %1930 = vmatpush1.msra.mxu0 0.0
    %1931 = vmatprep.subr.mxu0 0.0
    %1932 = vmatpush1.msra.mxu0 0.0
    %1933 = vmatprep.subr.mxu0 0.0
    %1934 = vmatpush1.msra.mxu0 0.0
    %1935 = vmatprep.subr.mxu0 0.0
    %1936 = vmatpush1.msra.mxu0 0.0
    %1937 = vmatprep.subr.mxu0 0.0
    %1938 = vmatpush1.msra.mxu0 0.0
    %1939 = vmatprep.subr.mxu0 0.0
    %1940 = vmatpush1.msra.mxu0 0.0
    %1941 = vmatprep.subr.mxu0 0.0
    %1942 = vmatpush1.msra.mxu0 0.0
    %1943 = vmatprep.subr.mxu0 0.0
    %1944 = vmatpush1.msra.mxu0 0.0
    %1945 = vmatprep.subr.mxu0 0.0
    %1946 = vmatpush1.msra.mxu0 0.0
    %1947 = vmatprep.subr.mxu0 0.0
    %1948 = vmatpush1.msra.mxu0 0.0
    %1949 = vmatprep.subr.mxu0 0.0
    %1950 = vmatpush1.msra.mxu0 0.0
    %1951 = vmatprep.subr.mxu0 0.0
    %1952 = vmatpush1.msra.mxu0 0.0
    %1953 = vmatprep.subr.mxu0 0.0
    %1954 = vmatpush1.msra.mxu0 0.0
    %1955 = vmatprep.subr.mxu0 0.0
    %1956 = vmatpush1.msra.mxu0 0.0
    %1957 = vmatprep.subr.mxu0 0.0
    %1958 = vmatpush1.msra.mxu0 0.0
    %1959 = vmatprep.subr.mxu0 0.0
    %1960 = vmatpush1.msra.mxu0 0.0
    %1961 = vmatprep.subr.mxu0 0.0
    %1962 = vmatpush1.msra.mxu0 0.0
    %1963 = vmatprep.subr.mxu0 0.0
    %1964 = vmatpush1.msra.mxu0 0.0
    %1965 = vmatprep.subr.mxu0 0.0
    %1966 = vmatpush1.msra.mxu0 0.0
    %1967 = vmatprep.subr.mxu0 0.0
    %1968 = vmatpush1.msra.mxu0 0.0
    %1969 = vmatprep.subr.mxu0 0.0
    %1970 = vmatpush1.msra.mxu0 0.0
    %1971 = vmatprep.subr.mxu0 0.0
    %1972 = vmatpush1.msra.mxu0 0.0
    %1973 = vmatprep.mubr.f32.mxu0 0.0
    %1974 = vmatmul.mubr.f32.gmra.mrb[0].mxu0 %v1907
    %v1975 = vpop.f32.mrb[0].mxu0
    %v1976 = vadd.f32 0.0, %v1975
    %v1977 = vpop.f32.mrb[0].mxu0
    %1978 = vdwg.mxu0
    %v1980 = vsel %vm1905, %v1882, 0
    %1982 = vmatprep.subr.mxu0 0.0
    %1983 = vmatpush1.msra.mxu0 %v1883
    %1984 = vmatprep.subr.mxu0 0.0
    %1985 = vmatpush1.msra.mxu0 %v1884
    %1986 = vmatprep.subr.mxu0 0.0
    %1987 = vmatpush1.msra.mxu0 %v1885
    %1988 = vmatprep.subr.mxu0 0.0
    %1989 = vmatpush1.msra.mxu0 %v1886
    %1990 = vmatprep.subr.mxu0 0.0
    %1991 = vmatpush1.msra.mxu0 %v1887
    %1992 = vmatprep.subr.mxu0 0.0
    %1993 = vmatpush1.msra.mxu0 %v1888
    %1994 = vmatprep.subr.mxu0 0.0
    %1995 = vmatpush1.msra.mxu0 %v1889
    %1996 = vmatprep.subr.mxu0 0.0
    %1997 = vmatpush1.msra.mxu0 %v1890
    %1998 = vmatprep.subr.mxu0 0.0
    %1999 = vmatpush1.msra.mxu0 0.0
    %2000 = vmatprep.subr.mxu0 0.0
    %2001 = vmatpush1.msra.mxu0 0.0
    %2002 = vmatprep.subr.mxu0 0.0
    %2003 = vmatpush1.msra.mxu0 0.0
    %2004 = vmatprep.subr.mxu0 0.0
    %2005 = vmatpush1.msra.mxu0 0.0
    %2006 = vmatprep.subr.mxu0 0.0
    %2007 = vmatpush1.msra.mxu0 0.0
    %2008 = vmatprep.subr.mxu0 0.0
    %2009 = vmatpush1.msra.mxu0 0.0
    %2010 = vmatprep.subr.mxu0 0.0
    %2011 = vmatpush1.msra.mxu0 0.0
    %2012 = vmatprep.subr.mxu0 0.0
    %2013 = vmatpush1.msra.mxu0 0.0
    %2014 = vmatprep.subr.mxu0 0.0
    %2015 = vmatpush1.msra.mxu0 0.0
    %2016 = vmatprep.subr.mxu0 0.0
    %2017 = vmatpush1.msra.mxu0 0.0
    %2018 = vmatprep.subr.mxu0 0.0
    %2019 = vmatpush1.msra.mxu0 0.0
    %2020 = vmatprep.subr.mxu0 0.0
    %2021 = vmatpush1.msra.mxu0 0.0
    %2022 = vmatprep.subr.mxu0 0.0
    %2023 = vmatpush1.msra.mxu0 0.0
    %2024 = vmatprep.subr.mxu0 0.0
    %2025 = vmatpush1.msra.mxu0 0.0
    %2026 = vmatprep.subr.mxu0 0.0
    %2027 = vmatpush1.msra.mxu0 0.0
    %2028 = vmatprep.subr.mxu0 0.0
    %2029 = vmatpush1.msra.mxu0 0.0
    %2030 = vmatprep.subr.mxu0 0.0
    %2031 = vmatpush1.msra.mxu0 0.0
    %2032 = vmatprep.subr.mxu0 0.0
    %2033 = vmatpush1.msra.mxu0 0.0
    %2034 = vmatprep.subr.mxu0 0.0
    %2035 = vmatpush1.msra.mxu0 0.0
    %2036 = vmatprep.subr.mxu0 0.0
    %2037 = vmatpush1.msra.mxu0 0.0
    %2038 = vmatprep.subr.mxu0 0.0
    %2039 = vmatpush1.msra.mxu0 0.0
    %2040 = vmatprep.subr.mxu0 0.0
    %2041 = vmatpush1.msra.mxu0 0.0
    %2042 = vmatprep.subr.mxu0 0.0
    %2043 = vmatpush1.msra.mxu0 0.0
    %2044 = vmatprep.subr.mxu0 0.0
    %2045 = vmatpush1.msra.mxu0 0.0
    %2046 = vmatprep.mubr.f32.mxu0 0.0
    %2047 = vmatmul.mubr.f32.gmra.mrb[0].mxu0 %v1980
    %v2048 = vpop.f32.mrb[0].mxu0
    %v2049 = vadd.f32 %v1976, %v2048
    %v2050 = vpop.f32.mrb[0].mxu0
    %2051 = vdwg.mxu0
    %v2052 = vrot.slane %v1874, 4
    %v2054 = vrot.slane %v1878, 3
    %v2056 = vsel %vm239, %v2052, %v2054
    %v2057 = vld [vmem:[%s5 + $0x80] sm:$0xff]
    %v2058 = vld [vmem:[%s5 + $0x88] sm:$0xff]
    %v2059 = vld [vmem:[%s5 + $0x90] sm:$0xff]
    %v2060 = vld [vmem:[%s5 + $0x98] sm:$0xff]
    %v2061 = vld [vmem:[%s5 + $0xa0] sm:$0xff]
    %v2062 = vld [vmem:[%s5 + $0xa8] sm:$0xff]
    %v2063 = vld [vmem:[%s5 + $0xb0] sm:$0xff]
    %v2064 = vld [vmem:[%s5 + $0xb8] sm:$0xff]
    %v2066 = vsel %vm1905, %v2056, 0
    %2068 = vmatprep.subr.mxu0 0.0
    %2069 = vmatpush1.msra.mxu0 %v2057
    %2070 = vmatprep.subr.mxu0 0.0
    %2071 = vmatpush1.msra.mxu0 %v2058
    %2072 = vmatprep.subr.mxu0 0.0
    %2073 = vmatpush1.msra.mxu0 %v2059
    %2074 = vmatprep.subr.mxu0 0.0
    %2075 = vmatpush1.msra.mxu0 %v2060
    %2076 = vmatprep.subr.mxu0 0.0
    %2077 = vmatpush1.msra.mxu0 %v2061
    %2078 = vmatprep.subr.mxu0 0.0
    %2079 = vmatpush1.msra.mxu0 %v2062
    %2080 = vmatprep.subr.mxu0 0.0
    %2081 = vmatpush1.msra.mxu0 %v2063
    %2082 = vmatprep.subr.mxu0 0.0
    %2083 = vmatpush1.msra.mxu0 %v2064
    %2084 = vmatprep.subr.mxu0 0.0
    %2085 = vmatpush1.msra.mxu0 0.0
    %2086 = vmatprep.subr.mxu0 0.0
    %2087 = vmatpush1.msra.mxu0 0.0
    %2088 = vmatprep.subr.mxu0 0.0
    %2089 = vmatpush1.msra.mxu0 0.0
    %2090 = vmatprep.subr.mxu0 0.0
    %2091 = vmatpush1.msra.mxu0 0.0
    %2092 = vmatprep.subr.mxu0 0.0
    %2093 = vmatpush1.msra.mxu0 0.0
    %2094 = vmatprep.subr.mxu0 0.0
    %2095 = vmatpush1.msra.mxu0 0.0
    %2096 = vmatprep.subr.mxu0 0.0
    %2097 = vmatpush1.msra.mxu0 0.0
    %2098 = vmatprep.subr.mxu0 0.0
    %2099 = vmatpush1.msra.mxu0 0.0
    %2100 = vmatprep.subr.mxu0 0.0
    %2101 = vmatpush1.msra.mxu0 0.0
    %2102 = vmatprep.subr.mxu0 0.0
    %2103 = vmatpush1.msra.mxu0 0.0
    %2104 = vmatprep.subr.mxu0 0.0
    %2105 = vmatpush1.msra.mxu0 0.0
    %2106 = vmatprep.subr.mxu0 0.0
    %2107 = vmatpush1.msra.mxu0 0.0
    %2108 = vmatprep.subr.mxu0 0.0
    %2109 = vmatpush1.msra.mxu0 0.0
    %2110 = vmatprep.subr.mxu0 0.0
    %2111 = vmatpush1.msra.mxu0 0.0
    %2112 = vmatprep.subr.mxu0 0.0
    %2113 = vmatpush1.msra.mxu0 0.0
    %2114 = vmatprep.subr.mxu0 0.0
    %2115 = vmatpush1.msra.mxu0 0.0
    %2116 = vmatprep.subr.mxu0 0.0
    %2117 = vmatpush1.msra.mxu0 0.0
    %2118 = vmatprep.subr.mxu0 0.0
    %2119 = vmatpush1.msra.mxu0 0.0
    %2120 = vmatprep.subr.mxu0 0.0
    %2121 = vmatpush1.msra.mxu0 0.0
    %2122 = vmatprep.subr.mxu0 0.0
    %2123 = vmatpush1.msra.mxu0 0.0
    %2124 = vmatprep.subr.mxu0 0.0
    %2125 = vmatpush1.msra.mxu0 0.0
    %2126 = vmatprep.subr.mxu0 0.0
    %2127 = vmatpush1.msra.mxu0 0.0
    %2128 = vmatprep.subr.mxu0 0.0
    %2129 = vmatpush1.msra.mxu0 0.0
    %2130 = vmatprep.subr.mxu0 0.0
    %2131 = vmatpush1.msra.mxu0 0.0
    %2132 = vmatprep.mubr.f32.mxu0 0.0
    %2133 = vmatmul.mubr.f32.gmra.mrb[0].mxu0 %v2066
    %v2134 = vpop.f32.mrb[0].mxu0
    %v2135 = vadd.f32 0.0, %v2134
    %v2136 = vpop.f32.mrb[0].mxu0
    %2137 = vdwg.mxu0
    %v2138 = vadd.f32 %v2049, %v2135
    %v2139 = vrot.slane %v1874, 6
    %v2141 = vrot.slane %v1878, 5
    %v2143 = vsel %vm239, %v2139, %v2141
    %v2144 = vld [vmem:[%s5 + $0xc0] sm:$0xff]
    %v2145 = vld [vmem:[%s5 + $0xc8] sm:$0xff]
    %v2146 = vld [vmem:[%s5 + $0xd0] sm:$0xff]
    %v2147 = vld [vmem:[%s5 + $0xd8] sm:$0xff]
    %v2148 = vld [vmem:[%s5 + $0xe0] sm:$0xff]
    %v2149 = vld [vmem:[%s5 + $0xe8] sm:$0xff]
    %v2150 = vld [vmem:[%s5 + $0xf0] sm:$0xff]
    %v2151 = vld [vmem:[%s5 + $0xf8] sm:$0xff]
    %v2153 = vsel %vm1905, %v2143, 0
    %2155 = vmatprep.subr.mxu0 0.0
    %2156 = vmatpush1.msra.mxu0 %v2144
    %2157 = vmatprep.subr.mxu0 0.0
    %2158 = vmatpush1.msra.mxu0 %v2145
    %2159 = vmatprep.subr.mxu0 0.0
    %2160 = vmatpush1.msra.mxu0 %v2146
    %2161 = vmatprep.subr.mxu0 0.0
    %2162 = vmatpush1.msra.mxu0 %v2147
    %2163 = vmatprep.subr.mxu0 0.0
    %2164 = vmatpush1.msra.mxu0 %v2148
    %2165 = vmatprep.subr.mxu0 0.0
    %2166 = vmatpush1.msra.mxu0 %v2149
    %2167 = vmatprep.subr.mxu0 0.0
    %2168 = vmatpush1.msra.mxu0 %v2150
    %2169 = vmatprep.subr.mxu0 0.0
    %2170 = vmatpush1.msra.mxu0 %v2151
    %2171 = vmatprep.subr.mxu0 0.0
    %2172 = vmatpush1.msra.mxu0 0.0
    %2173 = vmatprep.subr.mxu0 0.0
    %2174 = vmatpush1.msra.mxu0 0.0
    %2175 = vmatprep.subr.mxu0 0.0
    %2176 = vmatpush1.msra.mxu0 0.0
    %2177 = vmatprep.subr.mxu0 0.0
    %2178 = vmatpush1.msra.mxu0 0.0
    %2179 = vmatprep.subr.mxu0 0.0
    %2180 = vmatpush1.msra.mxu0 0.0
    %2181 = vmatprep.subr.mxu0 0.0
    %2182 = vmatpush1.msra.mxu0 0.0
    %2183 = vmatprep.subr.mxu0 0.0
    %2184 = vmatpush1.msra.mxu0 0.0
    %2185 = vmatprep.subr.mxu0 0.0
    %2186 = vmatpush1.msra.mxu0 0.0
    %2187 = vmatprep.subr.mxu0 0.0
    %2188 = vmatpush1.msra.mxu0 0.0
    %2189 = vmatprep.subr.mxu0 0.0
    %2190 = vmatpush1.msra.mxu0 0.0
    %2191 = vmatprep.subr.mxu0 0.0
    %2192 = vmatpush1.msra.mxu0 0.0
    %2193 = vmatprep.subr.mxu0 0.0
    %2194 = vmatpush1.msra.mxu0 0.0
    %2195 = vmatprep.subr.mxu0 0.0
    %2196 = vmatpush1.msra.mxu0 0.0
    %2197 = vmatprep.subr.mxu0 0.0
    %2198 = vmatpush1.msra.mxu0 0.0
    %2199 = vmatprep.subr.mxu0 0.0
    %2200 = vmatpush1.msra.mxu0 0.0
    %2201 = vmatprep.subr.mxu0 0.0
    %2202 = vmatpush1.msra.mxu0 0.0
    %2203 = vmatprep.subr.mxu0 0.0
    %2204 = vmatpush1.msra.mxu0 0.0
    %2205 = vmatprep.subr.mxu0 0.0
    %2206 = vmatpush1.msra.mxu0 0.0
    %2207 = vmatprep.subr.mxu0 0.0
    %2208 = vmatpush1.msra.mxu0 0.0
    %2209 = vmatprep.subr.mxu0 0.0
    %2210 = vmatpush1.msra.mxu0 0.0
    %2211 = vmatprep.subr.mxu0 0.0
    %2212 = vmatpush1.msra.mxu0 0.0
    %2213 = vmatprep.subr.mxu0 0.0
    %2214 = vmatpush1.msra.mxu0 0.0
    %2215 = vmatprep.subr.mxu0 0.0
    %2216 = vmatpush1.msra.mxu0 0.0
    %2217 = vmatprep.subr.mxu0 0.0
    %2218 = vmatpush1.msra.mxu0 0.0
    %2219 = vmatprep.mubr.f32.mxu0 0.0
    %2220 = vmatmul.mubr.f32.gmra.mrb[0].mxu0 %v2153
    %v2221 = vpop.f32.mrb[0].mxu0
    %v2222 = vadd.f32 0.0, %v2221
    %v2223 = vpop.f32.mrb[0].mxu0
    %2224 = vdwg.mxu0
    %v2225 = vadd.f32 %v2138, %v2222
    %v2226 = vld [vmem:[%s6] sm:$0x1]
    %v2228 = vlaneseq
    %v2229 = vshrl.u32 %v2228, 7
    %v2230 = vsub.s32 0, %v2229
    %v2231 = vrot.slane %v2226, %v2230
    %v2233 = vadd.f32 %v2225, %v2231
    %v2234 = vmax.f32 %v2233, 0.0
    %v2235 = vld [vmem:[%s7] sm:$0xff]
    %v2236 = vld [vmem:[%s7 + $0x8] sm:$0xff]
    %v2237 = vld [vmem:[%s7 + $0x10] sm:$0xff]
    %v2238 = vld [vmem:[%s7 + $0x18] sm:$0xff]
    %v2239 = vld [vmem:[%s7 + $0x20] sm:$0xff]
    %v2240 = vld [vmem:[%s7 + $0x28] sm:$0xff]
    %v2241 = vld [vmem:[%s7 + $0x30] sm:$0xff]
    %v2242 = vld [vmem:[%s7 + $0x38] sm:$0xff]
    %v2243 = vld [vmem:[%s7 + $0x40] sm:$0xff]
    %v2244 = vld [vmem:[%s7 + $0x48] sm:$0xff]
    %v2245 = vld [vmem:[%s7 + $0x50] sm:$0xff]
    %v2246 = vld [vmem:[%s7 + $0x58] sm:$0xff]
    %v2247 = vld [vmem:[%s7 + $0x60] sm:$0xff]
    %v2248 = vld [vmem:[%s7 + $0x68] sm:$0xff]
    %v2249 = vld [vmem:[%s7 + $0x70] sm:$0xff]
    %v2250 = vld [vmem:[%s7 + $0x78] sm:$0xff]
    %v2251 = vld [vmem:[%s8] sm:$0x1]
    %v2253 = vlaneseq
    %v2254 = vshrl.u32 %v2253, 7
    %v2255 = vsub.s32 0, %v2254
    %v2256 = vrot.slane %v2251, %v2255
    %2258 = vmatprep.subr.mxu0 0.0
    %2259 = vmatpush1.msra.mxu0 %v2235
    %2260 = vmatprep.subr.mxu0 0.0
    %2261 = vmatpush1.msra.mxu0 %v2236
    %2262 = vmatprep.subr.mxu0 0.0
    %2263 = vmatpush1.msra.mxu0 %v2237
    %2264 = vmatprep.subr.mxu0 0.0
    %2265 = vmatpush1.msra.mxu0 %v2238
    %2266 = vmatprep.subr.mxu0 0.0
    %2267 = vmatpush1.msra.mxu0 %v2239
    %2268 = vmatprep.subr.mxu0 0.0
    %2269 = vmatpush1.msra.mxu0 %v2240
    %2270 = vmatprep.subr.mxu0 0.0
    %2271 = vmatpush1.msra.mxu0 %v2241
    %2272 = vmatprep.subr.mxu0 0.0
    %2273 = vmatpush1.msra.mxu0 %v2242
    %2274 = vmatprep.subr.mxu0 0.0
    %2275 = vmatpush1.msra.mxu0 %v2243
    %2276 = vmatprep.subr.mxu0 0.0
    %2277 = vmatpush1.msra.mxu0 %v2244
    %2278 = vmatprep.subr.mxu0 0.0
    %2279 = vmatpush1.msra.mxu0 %v2245
    %2280 = vmatprep.subr.mxu0 0.0
    %2281 = vmatpush1.msra.mxu0 %v2246
    %2282 = vmatprep.subr.mxu0 0.0
    %2283 = vmatpush1.msra.mxu0 %v2247
    %2284 = vmatprep.subr.mxu0 0.0
    %2285 = vmatpush1.msra.mxu0 %v2248
    %2286 = vmatprep.subr.mxu0 0.0
    %2287 = vmatpush1.msra.mxu0 %v2249
    %2288 = vmatprep.subr.mxu0 0.0
    %2289 = vmatpush1.msra.mxu0 %v2250
    %2290 = vmatprep.subr.mxu0 0.0
    %2291 = vmatpush1.msra.mxu0 0.0
    %2292 = vmatprep.subr.mxu0 0.0
    %2293 = vmatpush1.msra.mxu0 0.0
    %2294 = vmatprep.subr.mxu0 0.0
    %2295 = vmatpush1.msra.mxu0 0.0
    %2296 = vmatprep.subr.mxu0 0.0
    %2297 = vmatpush1.msra.mxu0 0.0
    %2298 = vmatprep.subr.mxu0 0.0
    %2299 = vmatpush1.msra.mxu0 0.0
    %2300 = vmatprep.subr.mxu0 0.0
    %2301 = vmatpush1.msra.mxu0 0.0
    %2302 = vmatprep.subr.mxu0 0.0
    %2303 = vmatpush1.msra.mxu0 0.0
    %2304 = vmatprep.subr.mxu0 0.0
    %2305 = vmatpush1.msra.mxu0 0.0
    %2306 = vmatprep.subr.mxu0 0.0
    %2307 = vmatpush1.msra.mxu0 0.0
    %2308 = vmatprep.subr.mxu0 0.0
    %2309 = vmatpush1.msra.mxu0 0.0
    %2310 = vmatprep.subr.mxu0 0.0
    %2311 = vmatpush1.msra.mxu0 0.0
    %2312 = vmatprep.subr.mxu0 0.0
    %2313 = vmatpush1.msra.mxu0 0.0
    %2314 = vmatprep.subr.mxu0 0.0
    %2315 = vmatpush1.msra.mxu0 0.0
    %2316 = vmatprep.subr.mxu0 0.0
    %2317 = vmatpush1.msra.mxu0 0.0
    %2318 = vmatprep.subr.mxu0 0.0
    %2319 = vmatpush1.msra.mxu0 0.0
    %2320 = vmatprep.subr.mxu0 0.0
    %2321 = vmatpush1.msra.mxu0 0.0
    %2322 = vmatprep.mubr.f32.mxu0 0.0
    %2323 = vmatmul.mubr.f32.gmra.mrb[0].mxu0 %v2234
    %v2324 = vpop.f32.mrb[0].mxu0
    %v2325 = vadd.f32 %v2256, %v2324
    %v2326 = vpop.f32.mrb[0].mxu0
    %2327 = vdwg.mxu0
    %vm2328 = vcmask 74752
    %2329 = vst.msk [vmem:[#allocation2] sm:$0x3] %vm2328, %v2325
    // Predicated region
    $region38: #{simple_cnn_forward.1} parent=1 // pred_check
      _
    $region39: #{simple_cnn_forward.1} parent=1 // pred_check_branch
      %2331 = sbr.rel (0) target = $region41
    $region40: #{simple_cnn_forward.1} parent=1 // pred_region
      %s2333 = ssub.s32 32, 32
      %2334 = vsyncadd [#allocation3], %s2333
      %s2336 = sshll.u32 [#allocation2], 4
      %s2337 = int_to_ptr.vmem [resolvable:$true] %s2336
      %2339 = dma.vmem_to_hbm [thread:$0]  %s2337, 32, %s9, [#allocation3]
    $region41: #{simple_cnn_forward.1} parent=1 // pred_fallthru
      _
    // Predicated region
    $region42: #{simple_cnn_forward.1} parent=1 // pred_check
      _
    $region43: #{simple_cnn_forward.1} parent=1 // pred_check_branch
      %2341 = sbr.rel (0) target = $region45
    $region44: #{simple_cnn_forward.1} parent=1 // pred_region
      %2342 = dma.done [#allocation3], 32
    $region45: #{simple_cnn_forward.1} parent=1 // pred_fallthru
      _
    %2343 = vsyncpa [#allocation3], 1

</llo_original>
